<compile_context>
chip_gen: v5e
topology: v5e:2x2
jax: 0.10.0
libtpu: 0.0.40
codegen_flags: <defaults>
</compile_context>

<pallas_src>
import jax
import jax.numpy as jnp
from jax.experimental import pallas as pl
from jax.experimental.pallas import tpu as pltpu

_NEG_SLOPE = 0.2


def _leaky_relu(a):
    # max(a, slope*a) == LeakyReLU for slope in (0, 1); cheaper than where(a>0, a, slope*a).
    return jnp.maximum(a, _NEG_SLOPE * a)


def _make_kernel(compute_dtype, tail_dtype, mxu_classifier):
    def disc_kernel(x_ref,
                    w1_ref, b1_ref, w2_ref, b2_ref, w3_ref, b3_ref,
                    w4_ref, b4_ref, w5_ref, b5_ref, out_ref):
        # x arrives in its native dtype (f32); cast to the MXU compute dtype inside the
        # kernel so the wrapper never pays a separate full-HBM cast pass.
        h = x_ref[0].astype(compute_dtype)                    # (C_in, tm)

        def layer(w_ref, b_ref, h):
            acc = jnp.dot(w_ref[...], h, preferred_element_type=jnp.float32)
            a = acc.astype(tail_dtype) + b_ref[...]           # (C_out,1) bias broadcast over lanes
            return _leaky_relu(a)

        h = layer(w1_ref, b1_ref, h).astype(compute_dtype)
        h = layer(w2_ref, b2_ref, h).astype(compute_dtype)
        h = layer(w3_ref, b3_ref, h).astype(compute_dtype)
        h4 = layer(w4_ref, b4_ref, h)                         # tail_dtype

        if mxu_classifier:
            # (1, 8ndf) @ (8ndf, tm) on the MXU (plenty of slack on v6e/v7x), f32 accumulate.
            out = jnp.dot(w5_ref[...], h4.astype(compute_dtype),
                          preferred_element_type=jnp.float32) + b5_ref[...]
        else:
            # v5e path: keep the C_out=1 layer off the (tight) MXU:
            # VPU broadcast-multiply + XLU sublane reduce.
            out = jnp.sum(h4.astype(jnp.float32) * w5_ref[...],
                          axis=0, keepdims=True) + b5_ref[...]

        out_ref[0] = out.astype(out_ref.dtype)                # lane-dense (1, tm) store

    return disc_kernel


def _tpu_generation():
    try:
        kind = jax.devices()[0].device_kind.lower()
    except Exception:
        return ""
    for tag in ("v7", "v6", "v5", "v4", "v3", "v2"):
        if tag in kind:
            return tag
    return ""


def _gen_config(compute_dtype=jnp.bfloat16):
    gen = _tpu_generation()
    if gen == "v5":        # v5e/v5p: no bf16 VPU, slowest MXU, 128 MiB VMEM
        return dict(gen=gen, tail_dtype=jnp.float32, mxu_classifier=False,
                    default_tm=2048, vmem_limit=64 * 1024 * 1024, single_buffer=False)
    if gen == "v7":        # 64 MiB physical VMEM, 2 TensorCores per chip
        return dict(gen=gen, tail_dtype=compute_dtype, mxu_classifier=True,
                    default_tm=1024, vmem_limit=48 * 1024 * 1024, single_buffer=True)
    if gen in ("v2", "v3"):  # small-VMEM legacy chips: conservative tiling, default scoped VMEM
        return dict(gen=gen, tail_dtype=jnp.float32, mxu_classifier=True,
                    default_tm=512, vmem_limit=None, single_buffer=False)
    # v4 / v6e / unknown-newer
    return dict(gen=gen, tail_dtype=compute_dtype, mxu_classifier=True,
                default_tm=2048, vmem_limit=64 * 1024 * 1024, single_buffer=False)


def feature_discriminator(x_nchw, params, *, tm=None, compute_dtype=jnp.bfloat16):
    """x_nchw: (N, C_in, H, W) f32. params: list of (w, b), w (C_out, C_in), b (C_out, 1)."""
    N, C_in, H, W = x_nchw.shape
    M_pix = H * W

    cfg = _gen_config(compute_dtype)
    tail_dtype = cfg["tail_dtype"]
    mxu_classifier = cfg["mxu_classifier"]
    vmem_limit = cfg["vmem_limit"]
    single_buffer_params = cfg["single_buffer"]

    # Lane tile: multiple of 128, no larger than the (rounded-up) pixel count.
    if tm is None:
        tm = cfg["default_tm"]
    tm = max(128, min(tm, -(-M_pix // 128) * 128))
    tm = (tm // 128) * 128
    if cfg["gen"] == "v7":
        # Keep both TensorCores busy: always >= 2 grid steps, aim for >= 8.
        while N * (-(-M_pix // tm)) < 2 and tm > 128:
            tm = max(128, (tm // 2) // 128 * 128)
        while N * (-(-M_pix // tm)) < 8 and tm > 512:
            tm = max(128, (tm // 2) // 128 * 128)

    # Channels-on-sublane / pixels-on-lane layout: pure reshape, no transpose, no dtype pass.
    x = x_nchw.reshape(N, C_in, M_pix)

    # Only pad in the rare tiny-spatial case where one lane tile exceeds the pixel count;
    # a ragged *last* tile (M_pix % tm != 0) is handled by Pallas partial-block masking,
    # so no full-HBM jnp.pad pass is needed there.
    M_arr = max(M_pix, tm)
    if M_arr != M_pix:
        x = jnp.pad(x, ((0, 0), (0, 0), (0, M_arr - M_pix)))
    n_tiles = -(-M_arr // tm)

    (w1, b1), (w2, b2), (w3, b3), (w4, b4), (w5, b5) = params
    # Tiny params are cast once in the wrapper; activations are cast in-kernel.
    w1c, w2c, w3c, w4c = (w.astype(compute_dtype) for w in (w1, w2, w3, w4))
    b1c, b2c, b3c, b4c = (b.astype(tail_dtype) for b in (b1, b2, b3, b4))
    if mxu_classifier:
        w5c = w5.astype(compute_dtype)                  # (1, C4) row for the MXU matmul
    else:
        w5c = jnp.transpose(w5).astype(jnp.float32)     # (C4, 1) column for the sublane reduce
    b5c = b5.astype(jnp.float32)                        # (1, 1)

    kernel = _make_kernel(compute_dtype, tail_dtype, mxu_classifier)
    operands = (x, w1c, b1c, w2c, b2c, w3c, b3c, w4c, b4c, w5c, b5c)

    def build(single_buffer):
        def resident(arr):
            # Same block every grid step -> Pallas keeps it resident in VMEM.  On v7x also
            # drop the second pipeline buffer for these grid-invariant params.
            if single_buffer:
                return pl.BlockSpec(arr.shape, lambda n, i: (0, 0),
                                    pipeline_mode=pl.Buffered(1))
            return pl.BlockSpec(arr.shape, lambda n, i: (0, 0))

        return pl.pallas_call(
            kernel,
            out_shape=jax.ShapeDtypeStruct((N, 1, M_arr), x_nchw.dtype),
            grid_spec=pltpu.PrefetchScalarGridSpec(
                num_scalar_prefetch=0,
                grid=(N, n_tiles),
                in_specs=[
                    pl.BlockSpec((1, C_in, tm), lambda n, i: (n, 0, i)),
                    resident(w1c), resident(b1c),
                    resident(w2c), resident(b2c),
                    resident(w3c), resident(b3c),
                    resident(w4c), resident(b4c),
                    resident(w5c), resident(b5c),
                ],
                out_specs=pl.BlockSpec((1, 1, tm), lambda n, i: (n, 0, i)),
            ),
            compiler_params=pltpu.CompilerParams(
                dimension_semantics=("parallel", "parallel"),
                vmem_limit_bytes=vmem_limit),
        )

    try:
        out = build(single_buffer_params)(*operands)
    except Exception:
        if not single_buffer_params:
            raise
        # Fallback if this JAX build rejects pipeline_mode=pl.Buffered(1).
        out = build(False)(*operands)

    if M_arr != M_pix:
        out = out[:, :, :M_pix]
    return out.reshape(N, 1, H, W)


def init_params(key, input_size, ndf):
    """Deterministic init. w stored as (C_out, C_in) (PyTorch conv weight squeezed), b as (C_out, 1)."""
    dims = [(ndf, input_size),
            (ndf * 2, ndf),
            (ndf * 4, ndf * 2),
            (ndf * 8, ndf * 4),
            (1, ndf * 8)]
    params = []
    for (cout, cin) in dims:
        key, kw, kb = jax.random.split(key, 3)
        bound = 1.0 / (cin ** 0.5)   # PyTorch default conv init range
        w = jax.random.uniform(kw, (cout, cin), jnp.float32, -bound, bound)
        b = jax.random.uniform(kb, (cout, 1), jnp.float32, -bound, bound)
        params.append((w, b))
    return params


def reference_forward(x_nchw, params, *, compute_dtype=jnp.bfloat16,
                      tail_dtype=jnp.bfloat16, mxu_classifier=True):
    """Plain-JAX reference mirroring the kernel's exact cast points."""
    N, C, H, W = x_nchw.shape
    h = x_nchw.reshape(N, C, H * W).astype(compute_dtype)
    n_layers = len(params)
    out = None
    for idx, (w, b) in enumerate(params):
        if idx < n_layers - 1:
            w_f = w.astype(compute_dtype).astype(jnp.float32)
            h_f = h.astype(compute_dtype).astype(jnp.float32)
            acc = jnp.einsum('oc,ncm->nom', w_f, h_f)
            a = acc.astype(tail_dtype) + b.astype(tail_dtype)[None, :, :]
            h = jnp.maximum(a, _NEG_SLOPE * a)
        else:
            if mxu_classifier:
                w_f = w.astype(compute_dtype).astype(jnp.float32)
                h_f = h.astype(compute_dtype).astype(jnp.float32)
            else:
                w_f = w.astype(jnp.float32)
                h_f = h.astype(jnp.float32)
            out = jnp.einsum('oc,ncm->nom', w_f, h_f) + b.astype(jnp.float32)[None, :, :]
    return out.reshape(N, 1, H, W)


if __name__ == "__main__":
    key = jax.random.PRNGKey(0)
    kx, kp = jax.random.split(key)

    # Small shapes consistent with the module (input_size, ndf are ctor args).
    N, C_in, H, W = 2, 32, 16, 16
    ndf = 16

    x = jax.random.normal(kx, (N, C_in, H, W), jnp.float32)
    params = init_params(kp, C_in, ndf)

    out = feature_discriminator(x, params)
    out = jax.block_until_ready(out)

    cfg = _gen_config()
    ref = reference_forward(x, params,
                            tail_dtype=cfg["tail_dtype"],
                            mxu_classifier=cfg["mxu_classifier"])
    assert out.shape == (N, 1, H, W)
    max_err = float(jnp.max(jnp.abs(out - ref)))
    assert jnp.allclose(out, ref, atol=2e-2, rtol=2e-2), max_err

    print("KERNEL_OK")
</pallas_src>

<mosaic_0001>
module attributes {stable_mosaic.version = 11 : i64} {
  func.func @disc_kernel(%arg0: i32, %arg1: i32, %arg2: memref<1x32x256xf32, #tpu.memory_space<vmem>>, %arg3: memref<16x32xbf16, #tpu.memory_space<vmem>>, %arg4: memref<16x1xbf16, #tpu.memory_space<vmem>>, %arg5: memref<32x16xbf16, #tpu.memory_space<vmem>>, %arg6: memref<32x1xbf16, #tpu.memory_space<vmem>>, %arg7: memref<64x32xbf16, #tpu.memory_space<vmem>>, %arg8: memref<64x1xbf16, #tpu.memory_space<vmem>>, %arg9: memref<128x64xbf16, #tpu.memory_space<vmem>>, %arg10: memref<128x1xbf16, #tpu.memory_space<vmem>>, %arg11: memref<1x128xbf16, #tpu.memory_space<vmem>>, %arg12: memref<1x1xf32, #tpu.memory_space<vmem>>, %arg13: memref<1x1x256xf32, #tpu.memory_space<vmem>>) attributes {dimension_semantics = [#tpu.dimension_semantics<parallel>, #tpu.dimension_semantics<parallel>], iteration_bounds = array<i64: 2, 1>, scalar_prefetch = 0 : i64, scratch_operands = 0 : i64, tpu.core_type = #tpu.core_type<tc>, window_params = [{transform_indices = @transform_0, window_bounds = array<i64: 1, 32, 256>}, {pipeline_mode = #tpu.pipeline_mode<synchronous>, transform_indices = @transform_1, window_bounds = array<i64: 16, 32>}, {pipeline_mode = #tpu.pipeline_mode<synchronous>, transform_indices = @transform_2, window_bounds = array<i64: 16, 1>}, {pipeline_mode = #tpu.pipeline_mode<synchronous>, transform_indices = @transform_3, window_bounds = array<i64: 32, 16>}, {pipeline_mode = #tpu.pipeline_mode<synchronous>, transform_indices = @transform_4, window_bounds = array<i64: 32, 1>}, {pipeline_mode = #tpu.pipeline_mode<synchronous>, transform_indices = @transform_5, window_bounds = array<i64: 64, 32>}, {pipeline_mode = #tpu.pipeline_mode<synchronous>, transform_indices = @transform_6, window_bounds = array<i64: 64, 1>}, {pipeline_mode = #tpu.pipeline_mode<synchronous>, transform_indices = @transform_7, window_bounds = array<i64: 128, 64>}, {pipeline_mode = #tpu.pipeline_mode<synchronous>, transform_indices = @transform_8, window_bounds = array<i64: 128, 1>}, {pipeline_mode = #tpu.pipeline_mode<synchronous>, transform_indices = @transform_9, window_bounds = array<i64: 1, 128>}, {pipeline_mode = #tpu.pipeline_mode<synchronous>, transform_indices = @transform_10, window_bounds = array<i64: 1, 1>}, {transform_indices = @transform_11, window_bounds = array<i64: 1, 1, 256>}]} {
    %c0 = arith.constant 0 : index
    %c0_0 = arith.constant 0 : index
    %c0_1 = arith.constant 0 : index
    %0 = vector.load %arg2[%c0, %c0_0, %c0_1] : memref<1x32x256xf32, #tpu.memory_space<vmem>>, vector<1x32x256xf32>
    %1 = vector.shape_cast %0 : vector<1x32x256xf32> to vector<32x256xf32>
    %2 = arith.truncf %1 : vector<32x256xf32> to vector<32x256xbf16>
    %c0_2 = arith.constant 0 : index
    %c0_3 = arith.constant 0 : index
    %3 = vector.load %arg3[%c0_2, %c0_3] : memref<16x32xbf16, #tpu.memory_space<vmem>>, vector<16x32xbf16>
    %cst = arith.constant dense<0.000000e+00> : vector<16x256xf32>
    %4 = tpu.matmul %3, %2, %cst {dimension_numbers = #tpu.dot_dimension_numbers<[1], [0], [0], [1], [0, 0, 1, 1], [], []>} : vector<16x32xbf16>, vector<32x256xbf16>, vector<16x256xf32> -> vector<16x256xf32>
    %5 = arith.truncf %4 : vector<16x256xf32> to vector<16x256xbf16>
    %c0_4 = arith.constant 0 : index
    %c0_5 = arith.constant 0 : index
    %6 = vector.load %arg4[%c0_4, %c0_5] : memref<16x1xbf16, #tpu.memory_space<vmem>>, vector<16x1xbf16>
    %7 = vector.broadcast %6 : vector<16x1xbf16> to vector<16x256xbf16>
    %8 = arith.addf %5, %7 : vector<16x256xbf16>
    %cst_6 = arith.constant 2.001950e-01 : bf16
    %9 = vector.broadcast %cst_6 : bf16 to vector<16x256xbf16>
    %10 = arith.mulf %9, %8 : vector<16x256xbf16>
    %11 = arith.maximumf %8, %10 : vector<16x256xbf16>
    %c0_7 = arith.constant 0 : index
    %c0_8 = arith.constant 0 : index
    %12 = vector.load %arg5[%c0_7, %c0_8] : memref<32x16xbf16, #tpu.memory_space<vmem>>, vector<32x16xbf16>
    %cst_9 = arith.constant dense<0.000000e+00> : vector<32x256xf32>
    %13 = tpu.matmul %12, %11, %cst_9 {dimension_numbers = #tpu.dot_dimension_numbers<[1], [0], [0], [1], [0, 0, 1, 1], [], []>} : vector<32x16xbf16>, vector<16x256xbf16>, vector<32x256xf32> -> vector<32x256xf32>
    %14 = arith.truncf %13 : vector<32x256xf32> to vector<32x256xbf16>
    %c0_10 = arith.constant 0 : index
    %c0_11 = arith.constant 0 : index
    %15 = vector.load %arg6[%c0_10, %c0_11] : memref<32x1xbf16, #tpu.memory_space<vmem>>, vector<32x1xbf16>
    %16 = vector.broadcast %15 : vector<32x1xbf16> to vector<32x256xbf16>
    %17 = arith.addf %14, %16 : vector<32x256xbf16>
    %cst_12 = arith.constant 2.001950e-01 : bf16
    %18 = vector.broadcast %cst_12 : bf16 to vector<32x256xbf16>
    %19 = arith.mulf %18, %17 : vector<32x256xbf16>
    %20 = arith.maximumf %17, %19 : vector<32x256xbf16>
    %c0_13 = arith.constant 0 : index
    %c0_14 = arith.constant 0 : index
    %21 = vector.load %arg7[%c0_13, %c0_14] : memref<64x32xbf16, #tpu.memory_space<vmem>>, vector<64x32xbf16>
    %cst_15 = arith.constant dense<0.000000e+00> : vector<64x256xf32>
    %22 = tpu.matmul %21, %20, %cst_15 {dimension_numbers = #tpu.dot_dimension_numbers<[1], [0], [0], [1], [0, 0, 1, 1], [], []>} : vector<64x32xbf16>, vector<32x256xbf16>, vector<64x256xf32> -> vector<64x256xf32>
    %23 = arith.truncf %22 : vector<64x256xf32> to vector<64x256xbf16>
    %c0_16 = arith.constant 0 : index
    %c0_17 = arith.constant 0 : index
    %24 = vector.load %arg8[%c0_16, %c0_17] : memref<64x1xbf16, #tpu.memory_space<vmem>>, vector<64x1xbf16>
    %25 = vector.broadcast %24 : vector<64x1xbf16> to vector<64x256xbf16>
    %26 = arith.addf %23, %25 : vector<64x256xbf16>
    %cst_18 = arith.constant 2.001950e-01 : bf16
    %27 = vector.broadcast %cst_18 : bf16 to vector<64x256xbf16>
    %28 = arith.mulf %27, %26 : vector<64x256xbf16>
    %29 = arith.maximumf %26, %28 : vector<64x256xbf16>
    %c0_19 = arith.constant 0 : index
    %c0_20 = arith.constant 0 : index
    %30 = vector.load %arg9[%c0_19, %c0_20] : memref<128x64xbf16, #tpu.memory_space<vmem>>, vector<128x64xbf16>
    %cst_21 = arith.constant dense<0.000000e+00> : vector<128x256xf32>
    %31 = tpu.matmul %30, %29, %cst_21 {dimension_numbers = #tpu.dot_dimension_numbers<[1], [0], [0], [1], [0, 0, 1, 1], [], []>} : vector<128x64xbf16>, vector<64x256xbf16>, vector<128x256xf32> -> vector<128x256xf32>
    %32 = arith.truncf %31 : vector<128x256xf32> to vector<128x256xbf16>
    %c0_22 = arith.constant 0 : index
    %c0_23 = arith.constant 0 : index
    %33 = vector.load %arg10[%c0_22, %c0_23] : memref<128x1xbf16, #tpu.memory_space<vmem>>, vector<128x1xbf16>
    %34 = vector.broadcast %33 : vector<128x1xbf16> to vector<128x256xbf16>
    %35 = arith.addf %32, %34 : vector<128x256xbf16>
    %cst_24 = arith.constant 2.001950e-01 : bf16
    %36 = vector.broadcast %cst_24 : bf16 to vector<128x256xbf16>
    %37 = arith.mulf %36, %35 : vector<128x256xbf16>
    %38 = arith.maximumf %35, %37 : vector<128x256xbf16>
    %c0_25 = arith.constant 0 : index
    %c0_26 = arith.constant 0 : index
    %39 = vector.load %arg11[%c0_25, %c0_26] : memref<1x128xbf16, #tpu.memory_space<vmem>>, vector<1x128xbf16>
    %cst_27 = arith.constant dense<0.000000e+00> : vector<1x256xf32>
    %40 = tpu.matmul %39, %38, %cst_27 {dimension_numbers = #tpu.dot_dimension_numbers<[1], [0], [0], [1], [0, 0, 1, 1], [], []>} : vector<1x128xbf16>, vector<128x256xbf16>, vector<1x256xf32> -> vector<1x256xf32>
    %c0_28 = arith.constant 0 : index
    %c0_29 = arith.constant 0 : index
    %41 = vector.load %arg12[%c0_28, %c0_29] : memref<1x1xf32, #tpu.memory_space<vmem>>, vector<1x1xf32>
    %42 = vector.broadcast %41 : vector<1x1xf32> to vector<1x256xf32>
    %43 = arith.addf %40, %42 : vector<1x256xf32>
    %c0_30 = arith.constant 0 : index
    %c0_31 = arith.constant 0 : index
    %c0_32 = arith.constant 0 : index
    %44 = vector.load %arg13[%c0_30, %c0_31, %c0_32] : memref<1x1x256xf32, #tpu.memory_space<vmem>>, vector<1x1x256xf32>
    %45 = vector.shape_cast %44 : vector<1x1x256xf32> to vector<1x256xf32>
    %46 = vector.shape_cast %43 : vector<1x256xf32> to vector<1x1x256xf32>
    tpu.vector_store %arg13[%c0_30, %c0_31, %c0_32], %46 {strides = array<i32>} : memref<1x1x256xf32, #tpu.memory_space<vmem>>, vector<1x1x256xf32>,
    return
  }
  func.func @transform_0(%arg0: i32, %arg1: i32) -> (i32, i32, i32) {
    %c0_i32 = arith.constant 0 : i32
    %c0_i32_0 = arith.constant 0 : i32
    return %arg0, %c0_i32, %arg1 : i32, i32, i32
  }
  func.func @transform_1(%arg0: i32, %arg1: i32) -> (i32, i32) {
    %c0_i32 = arith.constant 0 : i32
    %c0_i32_0 = arith.constant 0 : i32
    %c0_i32_1 = arith.constant 0 : i32
    return %c0_i32, %c0_i32_0 : i32, i32
  }
  func.func @transform_2(%arg0: i32, %arg1: i32) -> (i32, i32) {
    %c0_i32 = arith.constant 0 : i32
    %c0_i32_0 = arith.constant 0 : i32
    %c0_i32_1 = arith.constant 0 : i32
    return %c0_i32, %c0_i32_0 : i32, i32
  }
  func.func @transform_3(%arg0: i32, %arg1: i32) -> (i32, i32) {
    %c0_i32 = arith.constant 0 : i32
    %c0_i32_0 = arith.constant 0 : i32
    %c0_i32_1 = arith.constant 0 : i32
    return %c0_i32, %c0_i32_0 : i32, i32
  }
  func.func @transform_4(%arg0: i32, %arg1: i32) -> (i32, i32) {
    %c0_i32 = arith.constant 0 : i32
    %c0_i32_0 = arith.constant 0 : i32
    %c0_i32_1 = arith.constant 0 : i32
    return %c0_i32, %c0_i32_0 : i32, i32
  }
  func.func @transform_5(%arg0: i32, %arg1: i32) -> (i32, i32) {
    %c0_i32 = arith.constant 0 : i32
    %c0_i32_0 = arith.constant 0 : i32
    %c0_i32_1 = arith.constant 0 : i32
    return %c0_i32, %c0_i32_0 : i32, i32
  }
  func.func @transform_6(%arg0: i32, %arg1: i32) -> (i32, i32) {
    %c0_i32 = arith.constant 0 : i32
    %c0_i32_0 = arith.constant 0 : i32
    %c0_i32_1 = arith.constant 0 : i32
    return %c0_i32, %c0_i32_0 : i32, i32
  }
  func.func @transform_7(%arg0: i32, %arg1: i32) -> (i32, i32) {
    %c0_i32 = arith.constant 0 : i32
    %c0_i32_0 = arith.constant 0 : i32
    %c0_i32_1 = arith.constant 0 : i32
    return %c0_i32, %c0_i32_0 : i32, i32
  }
  func.func @transform_8(%arg0: i32, %arg1: i32) -> (i32, i32) {
    %c0_i32 = arith.constant 0 : i32
    %c0_i32_0 = arith.constant 0 : i32
    %c0_i32_1 = arith.constant 0 : i32
    return %c0_i32, %c0_i32_0 : i32, i32
  }
  func.func @transform_9(%arg0: i32, %arg1: i32) -> (i32, i32) {
    %c0_i32 = arith.constant 0 : i32
    %c0_i32_0 = arith.constant 0 : i32
    %c0_i32_1 = arith.constant 0 : i32
    return %c0_i32, %c0_i32_0 : i32, i32
  }
  func.func @transform_10(%arg0: i32, %arg1: i32) -> (i32, i32) {
    %c0_i32 = arith.constant 0 : i32
    %c0_i32_0 = arith.constant 0 : i32
    %c0_i32_1 = arith.constant 0 : i32
    return %c0_i32, %c0_i32_0 : i32, i32
  }
  func.func @transform_11(%arg0: i32, %arg1: i32) -> (i32, i32, i32) {
    %c0_i32 = arith.constant 0 : i32
    %c0_i32_0 = arith.constant 0 : i32
    return %arg0, %c0_i32, %arg1 : i32, i32, i32
  }
}

</mosaic_0001>

<llo_original>
// kernel: tpu_custom_call.1
$region0: #{tpu_custom_call.1}
  #allocation0 [shape = 'u32[]', space=smem, size = 0x4, offset = 0x4, fixed_abs, tag = 'smem constant byte address 0x4 - core index']
  #allocation1 [shape = 'u32[72,128]{1,0:T(1,128)}', space=vmem, size = 0x9000, scoped, tag = 'internal scratch']
  #allocation2 [shape = 'f32[1,1]{1,0:T(1,128)S(1)}', space=vmem, size = 0x200, scoped, tag = 'scoped memory for tpu_custom_call.1']
  %s0 = inlined_call_operand.vmem [shape: f32[2,32,256], index: 0, kind: input, shape index: {}]
  %s1 = inlined_call_operand.vmem [shape: bf16[16,32], index: 1, kind: input, shape index: {}]
  %s2 = inlined_call_operand.vmem [shape: bf16[16,1], index: 2, kind: input, shape index: {}]
  %s3 = inlined_call_operand.vmem [shape: bf16[32,16], index: 3, kind: input, shape index: {}]
  %s4 = inlined_call_operand.vmem [shape: bf16[32,1], index: 4, kind: input, shape index: {}]
  %s5 = inlined_call_operand.vmem [shape: bf16[64,32], index: 5, kind: input, shape index: {}]
  %s6 = inlined_call_operand.vmem [shape: bf16[64,1], index: 6, kind: input, shape index: {}]
  %s7 = inlined_call_operand.vmem [shape: bf16[128,64], index: 7, kind: input, shape index: {}]
  %s8 = inlined_call_operand.vmem [shape: bf16[128,1], index: 8, kind: input, shape index: {}]
  %s9 = inlined_call_operand.vmem [shape: bf16[1,128], index: 9, kind: input, shape index: {}]
  %s10 = inlined_call_operand.<no memory space> [shape: f32[1,1], index: 10, kind: input, shape index: {}]
  %s11 = inlined_call_operand.hbm [shape: f32[2,1,256], index: 11, kind: output, shape index: {}]
  %s12 = sld [smem:[#allocation0]]
  $region77: #{tpu_custom_call.1} parent=0
    _
  %s14 = ssub.s32 1, %s12
  %s15 = scalar_select 0, %s14, %s12
  %v16 = vstv %s10
  %17 = vst [vmem:[#allocation2] sm:$0x1] %v16
  $region1: #{tpu_custom_call.1} parent=0
    #allocation3 [shape = 'u8[2048]{0}', space=vmem, size = 0x800, scoped, tag = 'output window, operand 0']
    #allocation4 [shape = 's32[2]{0}', space=sflag, size = 0x8, scoped, tag = 'scoped memory for tpu_custom_call.1']
    %18 = vsyncpa [#allocation4], 0
    %s19 = scalar_lea.sflag [#allocation4], 1
    %20 = vsyncpa %s19, 0
    loop: start=0, step=1, limit=4
    $region2: #{tpu_custom_call.1} parent=1 // loop_pre_header
      _
    $region3: #{tpu_custom_call.1} parent=1 // loop_header
      %s22 = sphi 0, %s26
      %p23 = scmp.ge.s32.totalorder %s22, 4
      %s29 = sphi 0, %s41
      %s30 = sphi 0, %s37
      %s31 = sphi 0, %s29
      %s32 = sphi 0, %s30
      %s33 = sphi 0, %s31
      %s34 = sphi 0, %s32
      %s46 = sphi 0, %s48
      %s49 = sphi 0, %s46
      %s50 = sphi 0, %s49
      %s66 = sphi 0, %s50
      %s70 = sphi 0, %s70
      %s72 = sphi 0, %s70
      %s73 = sphi 0, %s72
      %s87 = sphi 0, %s73
      %s91 = sphi 0, %s91
      %s93 = sphi 0, %s91
      %s94 = sphi 0, %s93
      %s108 = sphi 0, %s94
      %s112 = sphi 0, %s112
      %s114 = sphi 0, %s112
      %s115 = sphi 0, %s114
      %s129 = sphi 0, %s115
      %s133 = sphi 0, %s133
      %s135 = sphi 0, %s133
      %s136 = sphi 0, %s135
      %s150 = sphi 0, %s136
      %s154 = sphi 0, %s154
      %s156 = sphi 0, %s154
      %s157 = sphi 0, %s156
      %s171 = sphi 0, %s157
      %s175 = sphi 0, %s175
      %s177 = sphi 0, %s175
      %s178 = sphi 0, %s177
      %s192 = sphi 0, %s178
      %s196 = sphi 0, %s196
      %s198 = sphi 0, %s196
      %s199 = sphi 0, %s198
      %s213 = sphi 0, %s199
      %s217 = sphi 0, %s217
      %s219 = sphi 0, %s217
      %s220 = sphi 0, %s219
      %s234 = sphi 0, %s220
      %s238 = sphi 0, %s238
      %s240 = sphi 0, %s238
      %s241 = sphi 0, %s240
      %s255 = sphi 0, %s241
      %s259 = sphi 0, %s259
      %s261 = sphi 0, %s259
      %s262 = sphi 0, %s261
      %s276 = sphi 0, %s262
      %s284 = sphi 0, %s286
      %s287 = sphi 0, %s284
      %s288 = sphi 0, %s287
      %s304 = sphi 0, %s288
    $region4: #{tpu_custom_call.1} parent=1 // loop_header_branch
      %25 = sbr.rel (%p23) target = $region8
    $region5: #{tpu_custom_call.1} parent=1 // loop_body
      %s27 = ssub.s32 %s22, 1
      %s28 = ssub.s32 %s22, 2
      %s35 = sadd.s32 1, %s30
      %p36 = scmp.ge.s32.totalorder %s35, 1
      %s37 = scalar_select %p36, 0, %s35
      %s38 = sadd.s32 1, %s29
      %s39 = scalar_select %p36, %s38, %s29
      %p40 = scmp.ge.s32.totalorder %s39, 2
      %s41 = scalar_select %p40, 0, %s39
      %s42 = ssub.s32 %s29, %s41
      %s43 = ssub.s32 %s30, %s37
      %s44 = sor.u32 %s42, %s43
      %p45 = scmp.eq.s32.totalorder %s44, 0
      %s47 = sadd.s32 %s46, 1
      %s48 = scalar_select %p45, %s46, %s47
      %p51 = pneg %p45
      %p52 = scmp.eq.s32.totalorder %s22, 1
      %p53 = por %p51, %p52
      %p54 = scmp.ne.s32.totalorder %s46, %s49
      %p55 = scmp.eq.s32.totalorder %s22, 0
      %p56 = por %p54, %p55
      %p57 = scmp.ne.s32.totalorder %s46, %s49
      %p58 = scmp.eq.s32.totalorder %s27, 1
      %p59 = por %p57, %p58
      %p60 = scmp.ne.s32.totalorder %s49, %s50
      %p61 = scmp.eq.s32.totalorder %s27, 0
      %p62 = por %p60, %p61
      %p63 = scmp.ne.s32.totalorder %s49, %s50
      %p64 = scmp.eq.s32.totalorder %s28, 1
      %p65 = por %p63, %p64
      %p67 = scmp.ne.s32.totalorder %s50, %s66
      %p68 = scmp.eq.s32.totalorder %s28, 0
      %p69 = por %p67, %p68
      %s71 = sadd.s32 %s70, 1
      %p74 = scmp.eq.s32.totalorder %s22, 1
      %p75 = scmp.ne.s32.totalorder %s70, %s72
      %p76 = scmp.eq.s32.totalorder %s22, 0
      %p77 = por %p75, %p76
      %p78 = scmp.ne.s32.totalorder %s70, %s72
      %p79 = scmp.eq.s32.totalorder %s27, 1
      %p80 = por %p78, %p79
      %p81 = scmp.ne.s32.totalorder %s72, %s73
      %p82 = scmp.eq.s32.totalorder %s27, 0
      %p83 = por %p81, %p82
      %p84 = scmp.ne.s32.totalorder %s72, %s73
      %p85 = scmp.eq.s32.totalorder %s28, 1
      %p86 = por %p84, %p85
      %p88 = scmp.ne.s32.totalorder %s73, %s87
      %p89 = scmp.eq.s32.totalorder %s28, 0
      %p90 = por %p88, %p89
      %s92 = sadd.s32 %s91, 1
      %p95 = scmp.eq.s32.totalorder %s22, 1
      %p96 = scmp.ne.s32.totalorder %s91, %s93
      %p97 = scmp.eq.s32.totalorder %s22, 0
      %p98 = por %p96, %p97
      %p99 = scmp.ne.s32.totalorder %s91, %s93
      %p100 = scmp.eq.s32.totalorder %s27, 1
      %p101 = por %p99, %p100
      %p102 = scmp.ne.s32.totalorder %s93, %s94
      %p103 = scmp.eq.s32.totalorder %s27, 0
      %p104 = por %p102, %p103
      %p105 = scmp.ne.s32.totalorder %s93, %s94
      %p106 = scmp.eq.s32.totalorder %s28, 1
      %p107 = por %p105, %p106
      %p109 = scmp.ne.s32.totalorder %s94, %s108
      %p110 = scmp.eq.s32.totalorder %s28, 0
      %p111 = por %p109, %p110
      %s113 = sadd.s32 %s112, 1
      %p116 = scmp.eq.s32.totalorder %s22, 1
      %p117 = scmp.ne.s32.totalorder %s112, %s114
      %p118 = scmp.eq.s32.totalorder %s22, 0
      %p119 = por %p117, %p118
      %p120 = scmp.ne.s32.totalorder %s112, %s114
      %p121 = scmp.eq.s32.totalorder %s27, 1
      %p122 = por %p120, %p121
      %p123 = scmp.ne.s32.totalorder %s114, %s115
      %p124 = scmp.eq.s32.totalorder %s27, 0
      %p125 = por %p123, %p124
      %p126 = scmp.ne.s32.totalorder %s114, %s115
      %p127 = scmp.eq.s32.totalorder %s28, 1
      %p128 = por %p126, %p127
      %p130 = scmp.ne.s32.totalorder %s115, %s129
      %p131 = scmp.eq.s32.totalorder %s28, 0
      %p132 = por %p130, %p131
      %s134 = sadd.s32 %s133, 1
      %p137 = scmp.eq.s32.totalorder %s22, 1
      %p138 = scmp.ne.s32.totalorder %s133, %s135
      %p139 = scmp.eq.s32.totalorder %s22, 0
      %p140 = por %p138, %p139
      %p141 = scmp.ne.s32.totalorder %s133, %s135
      %p142 = scmp.eq.s32.totalorder %s27, 1
      %p143 = por %p141, %p142
      %p144 = scmp.ne.s32.totalorder %s135, %s136
      %p145 = scmp.eq.s32.totalorder %s27, 0
      %p146 = por %p144, %p145
      %p147 = scmp.ne.s32.totalorder %s135, %s136
      %p148 = scmp.eq.s32.totalorder %s28, 1
      %p149 = por %p147, %p148
      %p151 = scmp.ne.s32.totalorder %s136, %s150
      %p152 = scmp.eq.s32.totalorder %s28, 0
      %p153 = por %p151, %p152
      %s155 = sadd.s32 %s154, 1
      %p158 = scmp.eq.s32.totalorder %s22, 1
      %p159 = scmp.ne.s32.totalorder %s154, %s156
      %p160 = scmp.eq.s32.totalorder %s22, 0
      %p161 = por %p159, %p160
      %p162 = scmp.ne.s32.totalorder %s154, %s156
      %p163 = scmp.eq.s32.totalorder %s27, 1
      %p164 = por %p162, %p163
      %p165 = scmp.ne.s32.totalorder %s156, %s157
      %p166 = scmp.eq.s32.totalorder %s27, 0
      %p167 = por %p165, %p166
      %p168 = scmp.ne.s32.totalorder %s156, %s157
      %p169 = scmp.eq.s32.totalorder %s28, 1
      %p170 = por %p168, %p169
      %p172 = scmp.ne.s32.totalorder %s157, %s171
      %p173 = scmp.eq.s32.totalorder %s28, 0
      %p174 = por %p172, %p173
      %s176 = sadd.s32 %s175, 1
      %p179 = scmp.eq.s32.totalorder %s22, 1
      %p180 = scmp.ne.s32.totalorder %s175, %s177
      %p181 = scmp.eq.s32.totalorder %s22, 0
      %p182 = por %p180, %p181
      %p183 = scmp.ne.s32.totalorder %s175, %s177
      %p184 = scmp.eq.s32.totalorder %s27, 1
      %p185 = por %p183, %p184
      %p186 = scmp.ne.s32.totalorder %s177, %s178
      %p187 = scmp.eq.s32.totalorder %s27, 0
      %p188 = por %p186, %p187
      %p189 = scmp.ne.s32.totalorder %s177, %s178
      %p190 = scmp.eq.s32.totalorder %s28, 1
      %p191 = por %p189, %p190
      %p193 = scmp.ne.s32.totalorder %s178, %s192
      %p194 = scmp.eq.s32.totalorder %s28, 0
      %p195 = por %p193, %p194
      %s197 = sadd.s32 %s196, 1
      %p200 = scmp.eq.s32.totalorder %s22, 1
      %p201 = scmp.ne.s32.totalorder %s196, %s198
      %p202 = scmp.eq.s32.totalorder %s22, 0
      %p203 = por %p201, %p202
      %p204 = scmp.ne.s32.totalorder %s196, %s198
      %p205 = scmp.eq.s32.totalorder %s27, 1
      %p206 = por %p204, %p205
      %p207 = scmp.ne.s32.totalorder %s198, %s199
      %p208 = scmp.eq.s32.totalorder %s27, 0
      %p209 = por %p207, %p208
      %p210 = scmp.ne.s32.totalorder %s198, %s199
      %p211 = scmp.eq.s32.totalorder %s28, 1
      %p212 = por %p210, %p211
      %p214 = scmp.ne.s32.totalorder %s199, %s213
      %p215 = scmp.eq.s32.totalorder %s28, 0
      %p216 = por %p214, %p215
      %s218 = sadd.s32 %s217, 1
      %p221 = scmp.eq.s32.totalorder %s22, 1
      %p222 = scmp.ne.s32.totalorder %s217, %s219
      %p223 = scmp.eq.s32.totalorder %s22, 0
      %p224 = por %p222, %p223
      %p225 = scmp.ne.s32.totalorder %s217, %s219
      %p226 = scmp.eq.s32.totalorder %s27, 1
      %p227 = por %p225, %p226
      %p228 = scmp.ne.s32.totalorder %s219, %s220
      %p229 = scmp.eq.s32.totalorder %s27, 0
      %p230 = por %p228, %p229
      %p231 = scmp.ne.s32.totalorder %s219, %s220
      %p232 = scmp.eq.s32.totalorder %s28, 1
      %p233 = por %p231, %p232
      %p235 = scmp.ne.s32.totalorder %s220, %s234
      %p236 = scmp.eq.s32.totalorder %s28, 0
      %p237 = por %p235, %p236
      %s239 = sadd.s32 %s238, 1
      %p242 = scmp.eq.s32.totalorder %s22, 1
      %p243 = scmp.ne.s32.totalorder %s238, %s240
      %p244 = scmp.eq.s32.totalorder %s22, 0
      %p245 = por %p243, %p244
      %p246 = scmp.ne.s32.totalorder %s238, %s240
      %p247 = scmp.eq.s32.totalorder %s27, 1
      %p248 = por %p246, %p247
      %p249 = scmp.ne.s32.totalorder %s240, %s241
      %p250 = scmp.eq.s32.totalorder %s27, 0
      %p251 = por %p249, %p250
      %p252 = scmp.ne.s32.totalorder %s240, %s241
      %p253 = scmp.eq.s32.totalorder %s28, 1
      %p254 = por %p252, %p253
      %p256 = scmp.ne.s32.totalorder %s241, %s255
      %p257 = scmp.eq.s32.totalorder %s28, 0
      %p258 = por %p256, %p257
      %s260 = sadd.s32 %s259, 1
      %p263 = scmp.eq.s32.totalorder %s22, 1
      %p264 = scmp.ne.s32.totalorder %s259, %s261
      %p265 = scmp.eq.s32.totalorder %s22, 0
      %p266 = por %p264, %p265
      %p267 = scmp.ne.s32.totalorder %s259, %s261
      %p268 = scmp.eq.s32.totalorder %s27, 1
      %p269 = por %p267, %p268
      %p270 = scmp.ne.s32.totalorder %s261, %s262
      %p271 = scmp.eq.s32.totalorder %s27, 0
      %p272 = por %p270, %p271
      %p273 = scmp.ne.s32.totalorder %s261, %s262
      %p274 = scmp.eq.s32.totalorder %s28, 1
      %p275 = por %p273, %p274
      %p277 = scmp.ne.s32.totalorder %s262, %s276
      %p278 = scmp.eq.s32.totalorder %s28, 0
      %p279 = por %p277, %p278
      %s280 = ssub.s32 %s29, %s41
      %s281 = ssub.s32 %s30, %s37
      %s282 = sor.u32 %s280, %s281
      %p283 = scmp.eq.s32.totalorder %s282, 0
      %s285 = sadd.s32 %s284, 1
      %s286 = scalar_select %p283, %s284, %s285
      %p289 = pneg %p283
      %p290 = scmp.eq.s32.totalorder %s22, 1
      %p291 = por %p289, %p290
      %p292 = scmp.ne.s32.totalorder %s284, %s287
      %p293 = scmp.eq.s32.totalorder %s22, 0
      %p294 = por %p292, %p293
      %p295 = scmp.ne.s32.totalorder %s284, %s287
      %p296 = scmp.eq.s32.totalorder %s27, 1
      %p297 = por %p295, %p296
      %p298 = scmp.ne.s32.totalorder %s287, %s288
      %p299 = scmp.eq.s32.totalorder %s27, 0
      %p300 = por %p298, %p299
      %p301 = scmp.ne.s32.totalorder %s287, %s288
      %p302 = scmp.eq.s32.totalorder %s28, 1
      %p303 = por %p301, %p302
      %p305 = scmp.ne.s32.totalorder %s288, %s304
      %p306 = scmp.eq.s32.totalorder %s28, 0
      %p307 = por %p305, %p306
      %p308 = scmp.le.s32.totalorder 1, %s22
      %p309 = scmp.lt.s32.totalorder %s22, 3
      %p310 = pnand %p308, %p309
      %p311 = pneg %p310
      // Predicated region
      $region9: #{tpu_custom_call.1} parent=5 // pred_check
        _
      $region10: #{tpu_custom_call.1} parent=5 // pred_check_branch
        %313 = sbr.rel (%p310) target = $region12
      $region11: #{tpu_custom_call.1} parent=5 // pred_region
        %s314 = ssub.s32 %s22, 1
        // Predicated region
        $region13: #{tpu_custom_call.1} parent=11 // pred_check
          %p315 = pneg %p83
        $region14: #{tpu_custom_call.1} parent=11 // pred_check_branch
          %317 = sbr.rel (%p315) target = $region16
        $region15: #{tpu_custom_call.1} parent=11 // pred_region
          _
        $region16: #{tpu_custom_call.1} parent=11 // pred_fallthru
          _
        // Predicated region
        $region17: #{tpu_custom_call.1} parent=11 // pred_check
          %p318 = pneg %p104
        $region18: #{tpu_custom_call.1} parent=11 // pred_check_branch
          %320 = sbr.rel (%p318) target = $region20
        $region19: #{tpu_custom_call.1} parent=11 // pred_region
          _
        $region20: #{tpu_custom_call.1} parent=11 // pred_fallthru
          _
        // Predicated region
        $region21: #{tpu_custom_call.1} parent=11 // pred_check
          %p321 = pneg %p125
        $region22: #{tpu_custom_call.1} parent=11 // pred_check_branch
          %323 = sbr.rel (%p321) target = $region24
        $region23: #{tpu_custom_call.1} parent=11 // pred_region
          _
        $region24: #{tpu_custom_call.1} parent=11 // pred_fallthru
          _
        // Predicated region
        $region25: #{tpu_custom_call.1} parent=11 // pred_check
          %p324 = pneg %p146
        $region26: #{tpu_custom_call.1} parent=11 // pred_check_branch
          %326 = sbr.rel (%p324) target = $region28
        $region27: #{tpu_custom_call.1} parent=11 // pred_region
          _
        $region28: #{tpu_custom_call.1} parent=11 // pred_fallthru
          _
        // Predicated region
        $region29: #{tpu_custom_call.1} parent=11 // pred_check
          %p327 = pneg %p167
        $region30: #{tpu_custom_call.1} parent=11 // pred_check_branch
          %329 = sbr.rel (%p327) target = $region32
        $region31: #{tpu_custom_call.1} parent=11 // pred_region
          _
        $region32: #{tpu_custom_call.1} parent=11 // pred_fallthru
          _
        // Predicated region
        $region33: #{tpu_custom_call.1} parent=11 // pred_check
          %p330 = pneg %p188
        $region34: #{tpu_custom_call.1} parent=11 // pred_check_branch
          %332 = sbr.rel (%p330) target = $region36
        $region35: #{tpu_custom_call.1} parent=11 // pred_region
          _
        $region36: #{tpu_custom_call.1} parent=11 // pred_fallthru
          _
        // Predicated region
        $region37: #{tpu_custom_call.1} parent=11 // pred_check
          %p333 = pneg %p209
        $region38: #{tpu_custom_call.1} parent=11 // pred_check_branch
          %335 = sbr.rel (%p333) target = $region40
        $region39: #{tpu_custom_call.1} parent=11 // pred_region
          _
        $region40: #{tpu_custom_call.1} parent=11 // pred_fallthru
          _
        // Predicated region
        $region41: #{tpu_custom_call.1} parent=11 // pred_check
          %p336 = pneg %p230
        $region42: #{tpu_custom_call.1} parent=11 // pred_check_branch
          %338 = sbr.rel (%p336) target = $region44
        $region43: #{tpu_custom_call.1} parent=11 // pred_region
          _
        $region44: #{tpu_custom_call.1} parent=11 // pred_fallthru
          _
        // Predicated region
        $region45: #{tpu_custom_call.1} parent=11 // pred_check
          %p339 = pneg %p251
        $region46: #{tpu_custom_call.1} parent=11 // pred_check_branch
          %341 = sbr.rel (%p339) target = $region48
        $region47: #{tpu_custom_call.1} parent=11 // pred_region
          _
        $region48: #{tpu_custom_call.1} parent=11 // pred_fallthru
          _
        // Predicated region
        $region49: #{tpu_custom_call.1} parent=11 // pred_check
          %p342 = pneg %p272
        $region50: #{tpu_custom_call.1} parent=11 // pred_check_branch
          %344 = sbr.rel (%p342) target = $region52
        $region51: #{tpu_custom_call.1} parent=11 // pred_region
          _
        $region52: #{tpu_custom_call.1} parent=11 // pred_fallthru
          _
      $region12: #{tpu_custom_call.1} parent=5 // pred_fallthru
        _
      %p345 = scmp.lt.s32.totalorder %s22, 2
      // Predicated region
      $region53: #{tpu_custom_call.1} parent=5 // pred_check
        %p346 = pneg %p345
      $region54: #{tpu_custom_call.1} parent=5 // pred_check_branch
        %348 = sbr.rel (%p346) target = $region56
      $region55: #{tpu_custom_call.1} parent=5 // pred_region
        // Predicated region
        $region57: #{tpu_custom_call.1} parent=55 // pred_check
          %p349 = pneg %p56
        $region58: #{tpu_custom_call.1} parent=55 // pred_check_branch
          %351 = sbr.rel (%p349) target = $region60
        $region59: #{tpu_custom_call.1} parent=55 // pred_region
          %s352 = smul.u32 2, %s30
          %p353 = scmp.lt.s32.totalorder %s29, 1
          %s354 = scalar_select %p353, %s29, 1
          %p355 = scmp.lt.s32.totalorder %s352, 1
          %s356 = scalar_select %p355, %s352, 1
          %s357 = smul.addr %s354, 8
          %s358 = sadd.s32 %s356, %s357
          %s359 = smul.addr %s358, 8
          %s360 = scalar_lea.vmem %s0, %s359
          %s361 = smul.u32 2, %s30
        $region60: #{tpu_custom_call.1} parent=55 // pred_fallthru
          _
      $region56: #{tpu_custom_call.1} parent=5 // pred_fallthru
        _
      %p362 = scmp.le.s32.totalorder 1, %s22
      %p363 = scmp.lt.s32.totalorder %s22, 3
      %p364 = pnand %p362, %p363
      %p365 = pneg %p364
      // Predicated region
      $region61: #{tpu_custom_call.1} parent=5 // pred_check
        _
      $region62: #{tpu_custom_call.1} parent=5 // pred_check_branch
        %367 = sbr.rel (%p364) target = $region64
      $region63: #{tpu_custom_call.1} parent=5 // pred_region
        %s368 = ssub.s32 %s22, 1
        %s369 = smul.u32 2, %s32
        %p370 = scmp.lt.s32.totalorder %s31, 1
        %s371 = scalar_select %p370, %s31, 1
        %p372 = scmp.lt.s32.totalorder %s369, 1
        %s373 = scalar_select %p372, %s369, 1
        %s374 = smul.addr %s371, 8
        %s375 = sadd.s32 %s373, %s374
        %s376 = smul.addr %s375, 8
        %s377 = scalar_lea.vmem %s0, %s376
        %p378 = pneg %p62
        %p379 = pneg %p59
        %p380 = pneg %p83
        %p381 = pneg %p80
        %p382 = pneg %p104
        %p383 = pneg %p101
        %p384 = pneg %p125
        %p385 = pneg %p122
        %p386 = pneg %p146
        %p387 = pneg %p143
        %p388 = pneg %p167
        %p389 = pneg %p164
        %p390 = pneg %p188
        %p391 = pneg %p185
        %p392 = pneg %p209
        %p393 = pneg %p206
        %p394 = pneg %p230
        %p395 = pneg %p227
        %p396 = pneg %p251
        %p397 = pneg %p248
        %p398 = pneg %p272
        %p399 = pneg %p269
        %p400 = pneg %p300
        %p401 = pneg %p297
        %s402 = sand.u32 %s287, 1
        %s403 = scalar_lea.sflag [#allocation4], %s402
        %s404 = sand.u32 %s287, 1
        %s405 = smul.addr %s404, 2
        %s406 = scalar_lea.vmem [#allocation3], %s405
        %s407 = smul.u32 2, %s32
        %p408 = scmp.lt.s32.totalorder %s31, 1
        %s409 = scalar_select %p408, %s31, 1
        %p410 = scmp.lt.s32.totalorder %s407, 1
        %s411 = scalar_select %p410, %s407, 1
        %s412 = smul.addr %s409, 8
        %s413 = sadd.s32 %s411, %s412
        %s414 = smul.addr %s413, 8
        %s415 = scalar_lea.vmem %s0, %s414
        %s416 = smul.u32 2, %s32
        %s417 = smul.u32 2, %s32
        %v419 = vld [vmem:[%s415] sm:$0xff]
        %v420 = vld [vmem:[%s415 + $0x8] sm:$0xff]
        %v421 = vld [vmem:[%s415 + $0x10] sm:$0xff]
        %v422 = vld [vmem:[%s415 + $0x18] sm:$0xff]
        %v423 = vld [vmem:[%s415 + $0x20] sm:$0xff]
        %v424 = vld [vmem:[%s415 + $0x28] sm:$0xff]
        %v425 = vld [vmem:[%s415 + $0x30] sm:$0xff]
        %v426 = vld [vmem:[%s415 + $0x38] sm:$0xff]
        %v427 = vpack.c.bf16 %v421, %v419
        %v428 = vpack.c.bf16 %v422, %v420
        %v429 = vpack.c.bf16 %v425, %v423
        %v430 = vpack.c.bf16 %v426, %v424
        %v431 = vld [vmem:[%s1] sm:$0xf]
        %v432 = vld [vmem:[%s1 + $0x4] sm:$0xf]
        %v435 = vunpack.c.l.b16 %v431
        %v436 = vunpack.c.l.b16 %v432
        %v437 = vpack.c.b16 %v436, %v435
        %vm438 = vcmask 261120
        %v440 = vsel %vm438, %v437, 0
        %442 = vmatpush.bf16.msra.mxu0 0
        %443 = vmatpush.bf16.msra.mxu0 0
        %444 = vmatpush.bf16.msra.mxu0 0
        %445 = vmatpush.bf16.msra.mxu0 0
        %446 = vmatpush.bf16.msra.mxu0 0
        %447 = vmatpush.bf16.msra.mxu0 0
        %448 = vmatpush.bf16.msra.mxu0 %v429
        %449 = vmatpush.bf16.msra.mxu0 %v427
        %450 = vmatmul.bf16.gmra.mxu0 %v440
        %v451 = vpop.f32.mrf.mxu0
        %v452 = vadd.f32 0.0, %v451
        %v453 = vpop.f32.mrf.mxu0
        %v454 = vadd.f32 0.0, %v453
        %455 = vdwg.mxu0
        %456 = vmatpush.bf16.msra.mxu0 0
        %457 = vmatpush.bf16.msra.mxu0 0
        %458 = vmatpush.bf16.msra.mxu0 0
        %459 = vmatpush.bf16.msra.mxu0 0
        %460 = vmatpush.bf16.msra.mxu0 0
        %461 = vmatpush.bf16.msra.mxu0 0
        %462 = vmatpush.bf16.msra.mxu0 %v430
        %463 = vmatpush.bf16.msra.mxu0 %v428
        %464 = vmatmul.bf16.gmra.mxu0 %v440
        %v465 = vpop.f32.mrf.mxu0
        %v466 = vadd.f32 0.0, %v465
        %v467 = vpop.f32.mrf.mxu0
        %v468 = vadd.f32 0.0, %v467
        %469 = vdwg.mxu0
        %v470 = vpack.c.bf16 %v466, %v452
        %v471 = vpack.c.bf16 %v468, %v454
        %v472 = vld [vmem:[%s2] sm:$0xf]
        %v473 = vld [vmem:[%s2 + $0x4] sm:$0xf]
        %475 = vset.pattern.permute.xlu0 0
        %476 = vperm.xlu0 %475, %v472
        %v477 = vpop.permute.xlu0 %476
        %v480 = vunpack.c.l.s4 839922192
        %v481 = vunpack.c.0.s8 %v480
        %v482 = vperm.slane %v477, %v481
        %484 = vset.pattern.permute.xlu0 0
        %485 = vperm.xlu0 %484, %v473
        %v486 = vpop.permute.xlu0 %485
        %v489 = vunpack.c.l.s4 839922192
        %v490 = vunpack.c.0.s8 %v489
        %v491 = vperm.slane %v486, %v490
        %v492 = vunpack.c.l.bf16 %v470
        %v493 = vunpack.c.h.bf16 %v470
        %v494 = vunpack.c.l.bf16 %v471
        %v495 = vunpack.c.h.bf16 %v471
        %v496 = vunpack.c.l.bf16 %v482
        %v497 = vunpack.c.l.bf16 %v491
        %v498 = vadd.f32 %v492, %v496
        %v499 = vadd.f32 %v493, %v496
        %v500 = vadd.f32 %v494, %v497
        %v501 = vadd.f32 %v495, %v497
        %v502 = vpack.c.bf16 %v499, %v498
        %v503 = vpack.c.bf16 %v501, %v500
        %v504 = vunpack.c.l.bf16 %v502
        %v505 = vunpack.c.h.bf16 %v502
        %v506 = vunpack.c.l.bf16 %v503
        %v507 = vunpack.c.h.bf16 %v503
        %v508 = vmul.f32 %v504, 0.20019531
        %v509 = vmul.f32 %v505, 0.20019531
        %v510 = vmul.f32 %v506, 0.20019531
        %v511 = vmul.f32 %v507, 0.20019531
        %v512 = vpack.c.bf16 %v509, %v508
        %v513 = vpack.c.bf16 %v511, %v510
        %v514 = vunpack.c.l.bf16 %v512
        %v515 = vunpack.c.h.bf16 %v512
        %v516 = vunpack.c.l.bf16 %v513
        %v517 = vunpack.c.h.bf16 %v513
        %v518 = vmax.f32 %v504, %v514
        %v519 = vmax.f32 %v505, %v515
        %v520 = vmax.f32 %v506, %v516
        %v521 = vmax.f32 %v507, %v517
        %v522 = vpack.c.bf16 %v520, %v518
        %v523 = vpack.c.bf16 %v521, %v519
        %v524 = vld [vmem:[%s3] sm:$0xf]
        %v525 = vld [vmem:[%s3 + $0x4] sm:$0xf]
        %v526 = vld [vmem:[%s3 + $0x8] sm:$0xf]
        %v527 = vld [vmem:[%s3 + $0xc] sm:$0xf]
        %v532 = vunpack.c.l.b16 %v524
        %v533 = vunpack.c.l.b16 %v525
        %v534 = vunpack.c.l.b16 %v526
        %v535 = vunpack.c.l.b16 %v527
        %v536 = vpack.c.b16 %v533, %v532
        %v537 = vpack.c.b16 %v535, %v534
        %vm538 = vcmask 130048
        %v540 = vsel %vm538, %v536, 0
        %v543 = vsel %vm538, %v537, 0
        %545 = vmatpush.bf16.msra.mxu0 0
        %546 = vmatpush.bf16.msra.mxu0 0
        %547 = vmatpush.bf16.msra.mxu0 0
        %548 = vmatpush.bf16.msra.mxu0 0
        %549 = vmatpush.bf16.msra.mxu0 0
        %550 = vmatpush.bf16.msra.mxu0 0
        %551 = vmatpush.bf16.msra.mxu0 0
        %552 = vmatpush.bf16.msra.mxu0 %v522
        %553 = vmatmul.bf16.gmra.mxu0 %v540
        %v554 = vpop.f32.mrf.mxu0
        %v555 = vadd.f32 0.0, %v554
        %v556 = vpop.f32.mrf.mxu0
        %v557 = vadd.f32 0.0, %v556
        %558 = vmatmul.bf16.gmra.mxu0 %v543
        %v559 = vpop.f32.mrf.mxu0
        %v560 = vadd.f32 0.0, %v559
        %v561 = vpop.f32.mrf.mxu0
        %v562 = vadd.f32 0.0, %v561
        %563 = vdwg.mxu0
        %564 = vmatpush.bf16.msra.mxu0 0
        %565 = vmatpush.bf16.msra.mxu0 0
        %566 = vmatpush.bf16.msra.mxu0 0
        %567 = vmatpush.bf16.msra.mxu0 0
        %568 = vmatpush.bf16.msra.mxu0 0
        %569 = vmatpush.bf16.msra.mxu0 0
        %570 = vmatpush.bf16.msra.mxu0 0
        %571 = vmatpush.bf16.msra.mxu0 %v523
        %572 = vmatmul.bf16.gmra.mxu0 %v540
        %v573 = vpop.f32.mrf.mxu0
        %v574 = vadd.f32 0.0, %v573
        %v575 = vpop.f32.mrf.mxu0
        %v576 = vadd.f32 0.0, %v575
        %577 = vmatmul.bf16.gmra.mxu0 %v543
        %v578 = vpop.f32.mrf.mxu0
        %v579 = vadd.f32 0.0, %v578
        %v580 = vpop.f32.mrf.mxu0
        %v581 = vadd.f32 0.0, %v580
        %582 = vdwg.mxu0
        %v583 = vpack.c.bf16 %v574, %v555
        %v584 = vpack.c.bf16 %v576, %v557
        %v585 = vpack.c.bf16 %v579, %v560
        %v586 = vpack.c.bf16 %v581, %v562
        %v587 = vld [vmem:[%s4] sm:$0xf]
        %v588 = vld [vmem:[%s4 + $0x4] sm:$0xf]
        %v589 = vld [vmem:[%s4 + $0x8] sm:$0xf]
        %v590 = vld [vmem:[%s4 + $0xc] sm:$0xf]
        %592 = vset.pattern.permute.xlu0 0
        %593 = vperm.xlu0 %592, %v587
        %v594 = vpop.permute.xlu0 %593
        %v597 = vunpack.c.l.s4 839922192
        %v598 = vunpack.c.0.s8 %v597
        %v599 = vperm.slane %v594, %v598
        %601 = vset.pattern.permute.xlu0 0
        %602 = vperm.xlu0 %601, %v588
        %v603 = vpop.permute.xlu0 %602
        %v606 = vunpack.c.l.s4 839922192
        %v607 = vunpack.c.0.s8 %v606
        %v608 = vperm.slane %v603, %v607
        %610 = vset.pattern.permute.xlu0 0
        %611 = vperm.xlu0 %610, %v589
        %v612 = vpop.permute.xlu0 %611
        %v615 = vunpack.c.l.s4 839922192
        %v616 = vunpack.c.0.s8 %v615
        %v617 = vperm.slane %v612, %v616
        %619 = vset.pattern.permute.xlu0 0
        %620 = vperm.xlu0 %619, %v590
        %v621 = vpop.permute.xlu0 %620
        %v624 = vunpack.c.l.s4 839922192
        %v625 = vunpack.c.0.s8 %v624
        %v626 = vperm.slane %v621, %v625
        %v627 = vunpack.c.l.bf16 %v583
        %v628 = vunpack.c.h.bf16 %v583
        %v629 = vunpack.c.l.bf16 %v584
        %v630 = vunpack.c.h.bf16 %v584
        %v631 = vunpack.c.l.bf16 %v585
        %v632 = vunpack.c.h.bf16 %v585
        %v633 = vunpack.c.l.bf16 %v586
        %v634 = vunpack.c.h.bf16 %v586
        %v635 = vunpack.c.l.bf16 %v599
        %v636 = vunpack.c.l.bf16 %v608
        %v637 = vunpack.c.l.bf16 %v617
        %v638 = vunpack.c.l.bf16 %v626
        %v639 = vadd.f32 %v627, %v635
        %v640 = vadd.f32 %v628, %v635
        %v641 = vadd.f32 %v629, %v636
        %v642 = vadd.f32 %v630, %v636
        %v643 = vadd.f32 %v631, %v637
        %v644 = vadd.f32 %v632, %v637
        %v645 = vadd.f32 %v633, %v638
        %v646 = vadd.f32 %v634, %v638
        %v647 = vpack.c.bf16 %v640, %v639
        %v648 = vpack.c.bf16 %v642, %v641
        %v649 = vpack.c.bf16 %v644, %v643
        %v650 = vpack.c.bf16 %v646, %v645
        %v651 = vunpack.c.l.bf16 %v647
        %v652 = vunpack.c.h.bf16 %v647
        %v653 = vunpack.c.l.bf16 %v648
        %v654 = vunpack.c.h.bf16 %v648
        %v655 = vunpack.c.l.bf16 %v649
        %v656 = vunpack.c.h.bf16 %v649
        %v657 = vunpack.c.l.bf16 %v650
        %v658 = vunpack.c.h.bf16 %v650
        %v659 = vmul.f32 %v651, 0.20019531
        %v660 = vmul.f32 %v652, 0.20019531
        %v661 = vmul.f32 %v653, 0.20019531
        %v662 = vmul.f32 %v654, 0.20019531
        %v663 = vmul.f32 %v655, 0.20019531
        %v664 = vmul.f32 %v656, 0.20019531
        %v665 = vmul.f32 %v657, 0.20019531
        %v666 = vmul.f32 %v658, 0.20019531
        %v667 = vpack.c.bf16 %v660, %v659
        %v668 = vpack.c.bf16 %v662, %v661
        %v669 = vpack.c.bf16 %v664, %v663
        %v670 = vpack.c.bf16 %v666, %v665
        %v671 = vunpack.c.l.bf16 %v667
        %v672 = vunpack.c.h.bf16 %v667
        %v673 = vunpack.c.l.bf16 %v668
        %v674 = vunpack.c.h.bf16 %v668
        %v675 = vunpack.c.l.bf16 %v669
        %v676 = vunpack.c.h.bf16 %v669
        %v677 = vunpack.c.l.bf16 %v670
        %v678 = vunpack.c.h.bf16 %v670
        %v679 = vmax.f32 %v651, %v671
        %v680 = vmax.f32 %v652, %v672
        %v681 = vmax.f32 %v653, %v673
        %v682 = vmax.f32 %v654, %v674
        %v683 = vmax.f32 %v655, %v675
        %v684 = vmax.f32 %v656, %v676
        %v685 = vmax.f32 %v657, %v677
        %v686 = vmax.f32 %v658, %v678
        %v687 = vpack.c.bf16 %v681, %v679
        %v688 = vpack.c.bf16 %v682, %v680
        %v689 = vpack.c.bf16 %v685, %v683
        %v690 = vpack.c.bf16 %v686, %v684
        %v691 = vld [vmem:[%s5] sm:$0xf]
        %v692 = vld [vmem:[%s5 + $0x4] sm:$0xf]
        %v693 = vld [vmem:[%s5 + $0x8] sm:$0xf]
        %v694 = vld [vmem:[%s5 + $0xc] sm:$0xf]
        %v695 = vld [vmem:[%s5 + $0x10] sm:$0xf]
        %v696 = vld [vmem:[%s5 + $0x14] sm:$0xf]
        %v697 = vld [vmem:[%s5 + $0x18] sm:$0xf]
        %v698 = vld [vmem:[%s5 + $0x1c] sm:$0xf]
        %v707 = vunpack.c.l.b16 %v691
        %v708 = vunpack.c.l.b16 %v692
        %v709 = vunpack.c.l.b16 %v693
        %v710 = vunpack.c.l.b16 %v694
        %v711 = vunpack.c.l.b16 %v695
        %v712 = vunpack.c.l.b16 %v696
        %v713 = vunpack.c.l.b16 %v697
        %v714 = vunpack.c.l.b16 %v698
        %v715 = vpack.c.b16 %v708, %v707
        %v716 = vpack.c.b16 %v710, %v709
        %v717 = vpack.c.b16 %v712, %v711
        %v718 = vpack.c.b16 %v714, %v713
        %v720 = vsel %vm438, %v715, 0
        %v723 = vsel %vm438, %v716, 0
        %v726 = vsel %vm438, %v717, 0
        %v729 = vsel %vm438, %v718, 0
        %731 = vmatpush.bf16.msra.mxu0 0
        %732 = vmatpush.bf16.msra.mxu0 0
        %733 = vmatpush.bf16.msra.mxu0 0
        %734 = vmatpush.bf16.msra.mxu0 0
        %735 = vmatpush.bf16.msra.mxu0 0
        %736 = vmatpush.bf16.msra.mxu0 0
        %737 = vmatpush.bf16.msra.mxu0 %v689
        %738 = vmatpush.bf16.msra.mxu0 %v687
        %739 = vmatmul.bf16.gmra.mxu0 %v720
        %v740 = vpop.f32.mrf.mxu0
        %v741 = vadd.f32 0.0, %v740
        %v742 = vpop.f32.mrf.mxu0
        %v743 = vadd.f32 0.0, %v742
        %744 = vmatmul.bf16.gmra.mxu0 %v723
        %v745 = vpop.f32.mrf.mxu0
        %v746 = vadd.f32 0.0, %v745
        %v747 = vpop.f32.mrf.mxu0
        %v748 = vadd.f32 0.0, %v747
        %749 = vmatmul.bf16.gmra.mxu0 %v726
        %v750 = vpop.f32.mrf.mxu0
        %v751 = vadd.f32 0.0, %v750
        %v752 = vpop.f32.mrf.mxu0
        %v753 = vadd.f32 0.0, %v752
        %754 = vmatmul.bf16.gmra.mxu0 %v729
        %v755 = vpop.f32.mrf.mxu0
        %v756 = vadd.f32 0.0, %v755
        %v757 = vpop.f32.mrf.mxu0
        %v758 = vadd.f32 0.0, %v757
        %759 = vdwg.mxu0
        %760 = vmatpush.bf16.msra.mxu0 0
        %761 = vmatpush.bf16.msra.mxu0 0
        %762 = vmatpush.bf16.msra.mxu0 0
        %763 = vmatpush.bf16.msra.mxu0 0
        %764 = vmatpush.bf16.msra.mxu0 0
        %765 = vmatpush.bf16.msra.mxu0 0
        %766 = vmatpush.bf16.msra.mxu0 %v690
        %767 = vmatpush.bf16.msra.mxu0 %v688
        %768 = vmatmul.bf16.gmra.mxu0 %v720
        %v769 = vpop.f32.mrf.mxu0
        %v770 = vadd.f32 0.0, %v769
        %v771 = vpop.f32.mrf.mxu0
        %v772 = vadd.f32 0.0, %v771
        %773 = vmatmul.bf16.gmra.mxu0 %v723
        %v774 = vpop.f32.mrf.mxu0
        %v775 = vadd.f32 0.0, %v774
        %v776 = vpop.f32.mrf.mxu0
        %v777 = vadd.f32 0.0, %v776
        %778 = vmatmul.bf16.gmra.mxu0 %v726
        %v779 = vpop.f32.mrf.mxu0
        %v780 = vadd.f32 0.0, %v779
        %v781 = vpop.f32.mrf.mxu0
        %v782 = vadd.f32 0.0, %v781
        %783 = vmatmul.bf16.gmra.mxu0 %v729
        %v784 = vpop.f32.mrf.mxu0
        %v785 = vadd.f32 0.0, %v784
        %v786 = vpop.f32.mrf.mxu0
        %v787 = vadd.f32 0.0, %v786
        %788 = vdwg.mxu0
        %v789 = vpack.c.bf16 %v770, %v741
        %v790 = vpack.c.bf16 %v772, %v743
        %v791 = vpack.c.bf16 %v775, %v746
        %v792 = vpack.c.bf16 %v777, %v748
        %v793 = vpack.c.bf16 %v780, %v751
        %v794 = vpack.c.bf16 %v782, %v753
        %v795 = vpack.c.bf16 %v785, %v756
        %v796 = vpack.c.bf16 %v787, %v758
        %v797 = vld [vmem:[%s6] sm:$0xf]
        %v798 = vld [vmem:[%s6 + $0x4] sm:$0xf]
        %v799 = vld [vmem:[%s6 + $0x8] sm:$0xf]
        %v800 = vld [vmem:[%s6 + $0xc] sm:$0xf]
        %v801 = vld [vmem:[%s6 + $0x10] sm:$0xf]
        %v802 = vld [vmem:[%s6 + $0x14] sm:$0xf]
        %v803 = vld [vmem:[%s6 + $0x18] sm:$0xf]
        %v804 = vld [vmem:[%s6 + $0x1c] sm:$0xf]
        %806 = vset.pattern.permute.xlu0 0
        %807 = vperm.xlu0 %806, %v797
        %v808 = vpop.permute.xlu0 %807
        %v811 = vunpack.c.l.s4 839922192
        %v812 = vunpack.c.0.s8 %v811
        %v813 = vperm.slane %v808, %v812
        %815 = vset.pattern.permute.xlu0 0
        %816 = vperm.xlu0 %815, %v798
        %v817 = vpop.permute.xlu0 %816
        %v820 = vunpack.c.l.s4 839922192
        %v821 = vunpack.c.0.s8 %v820
        %v822 = vperm.slane %v817, %v821
        %824 = vset.pattern.permute.xlu0 0
        %825 = vperm.xlu0 %824, %v799
        %v826 = vpop.permute.xlu0 %825
        %v829 = vunpack.c.l.s4 839922192
        %v830 = vunpack.c.0.s8 %v829
        %v831 = vperm.slane %v826, %v830
        %833 = vset.pattern.permute.xlu0 0
        %834 = vperm.xlu0 %833, %v800
        %v835 = vpop.permute.xlu0 %834
        %v838 = vunpack.c.l.s4 839922192
        %v839 = vunpack.c.0.s8 %v838
        %v840 = vperm.slane %v835, %v839
        %842 = vset.pattern.permute.xlu0 0
        %843 = vperm.xlu0 %842, %v801
        %v844 = vpop.permute.xlu0 %843
        %v847 = vunpack.c.l.s4 839922192
        %v848 = vunpack.c.0.s8 %v847
        %v849 = vperm.slane %v844, %v848
        %851 = vset.pattern.permute.xlu0 0
        %852 = vperm.xlu0 %851, %v802
        %v853 = vpop.permute.xlu0 %852
        %v856 = vunpack.c.l.s4 839922192
        %v857 = vunpack.c.0.s8 %v856
        %v858 = vperm.slane %v853, %v857
        %860 = vset.pattern.permute.xlu0 0
        %861 = vperm.xlu0 %860, %v803
        %v862 = vpop.permute.xlu0 %861
        %v865 = vunpack.c.l.s4 839922192
        %v866 = vunpack.c.0.s8 %v865
        %v867 = vperm.slane %v862, %v866
        %869 = vset.pattern.permute.xlu0 0
        %870 = vperm.xlu0 %869, %v804
        %v871 = vpop.permute.xlu0 %870
        %v874 = vunpack.c.l.s4 839922192
        %v875 = vunpack.c.0.s8 %v874
        %v876 = vperm.slane %v871, %v875
        %v877 = vunpack.c.l.bf16 %v789
        %v878 = vunpack.c.h.bf16 %v789
        %v879 = vunpack.c.l.bf16 %v790
        %v880 = vunpack.c.h.bf16 %v790
        %v881 = vunpack.c.l.bf16 %v791
        %v882 = vunpack.c.h.bf16 %v791
        %v883 = vunpack.c.l.bf16 %v792
        %v884 = vunpack.c.h.bf16 %v792
        %v885 = vunpack.c.l.bf16 %v793
        %v886 = vunpack.c.h.bf16 %v793
        %v887 = vunpack.c.l.bf16 %v794
        %v888 = vunpack.c.h.bf16 %v794
        %v889 = vunpack.c.l.bf16 %v795
        %v890 = vunpack.c.h.bf16 %v795
        %v891 = vunpack.c.l.bf16 %v796
        %v892 = vunpack.c.h.bf16 %v796
        %v893 = vunpack.c.l.bf16 %v813
        %v894 = vunpack.c.l.bf16 %v822
        %v895 = vunpack.c.l.bf16 %v831
        %v896 = vunpack.c.l.bf16 %v840
        %v897 = vunpack.c.l.bf16 %v849
        %v898 = vunpack.c.l.bf16 %v858
        %v899 = vunpack.c.l.bf16 %v867
        %v900 = vunpack.c.l.bf16 %v876
        %v901 = vadd.f32 %v877, %v893
        %v902 = vadd.f32 %v878, %v893
        %v903 = vadd.f32 %v879, %v894
        %v904 = vadd.f32 %v880, %v894
        %v905 = vadd.f32 %v881, %v895
        %v906 = vadd.f32 %v882, %v895
        %v907 = vadd.f32 %v883, %v896
        %v908 = vadd.f32 %v884, %v896
        %v909 = vadd.f32 %v885, %v897
        %v910 = vadd.f32 %v886, %v897
        %v911 = vadd.f32 %v887, %v898
        %v912 = vadd.f32 %v888, %v898
        %v913 = vadd.f32 %v889, %v899
        %v914 = vadd.f32 %v890, %v899
        %v915 = vadd.f32 %v891, %v900
        %v916 = vadd.f32 %v892, %v900
        %v917 = vpack.c.bf16 %v902, %v901
        %v918 = vpack.c.bf16 %v904, %v903
        %v919 = vpack.c.bf16 %v906, %v905
        %v920 = vpack.c.bf16 %v908, %v907
        %v921 = vpack.c.bf16 %v910, %v909
        %v922 = vpack.c.bf16 %v912, %v911
        %v923 = vpack.c.bf16 %v914, %v913
        %v924 = vpack.c.bf16 %v916, %v915
        %v925 = vunpack.c.l.bf16 %v917
        %v926 = vunpack.c.h.bf16 %v917
        %v927 = vunpack.c.l.bf16 %v918
        %v928 = vunpack.c.h.bf16 %v918
        %v929 = vunpack.c.l.bf16 %v919
        %v930 = vunpack.c.h.bf16 %v919
        %v931 = vunpack.c.l.bf16 %v920
        %v932 = vunpack.c.h.bf16 %v920
        %v933 = vunpack.c.l.bf16 %v921
        %v934 = vunpack.c.h.bf16 %v921
        %v935 = vunpack.c.l.bf16 %v922
        %v936 = vunpack.c.h.bf16 %v922
        %v937 = vunpack.c.l.bf16 %v923
        %v938 = vunpack.c.h.bf16 %v923
        %v939 = vunpack.c.l.bf16 %v924
        %v940 = vunpack.c.h.bf16 %v924
        %v941 = vmul.f32 %v925, 0.20019531
        %v942 = vmul.f32 %v926, 0.20019531
        %v943 = vmul.f32 %v927, 0.20019531
        %v944 = vmul.f32 %v928, 0.20019531
        %v945 = vmul.f32 %v929, 0.20019531
        %v946 = vmul.f32 %v930, 0.20019531
        %v947 = vmul.f32 %v931, 0.20019531
        %v948 = vmul.f32 %v932, 0.20019531
        %v949 = vmul.f32 %v933, 0.20019531
        %v950 = vmul.f32 %v934, 0.20019531
        %v951 = vmul.f32 %v935, 0.20019531
        %v952 = vmul.f32 %v936, 0.20019531
        %v953 = vmul.f32 %v937, 0.20019531
        %v954 = vmul.f32 %v938, 0.20019531
        %v955 = vmul.f32 %v939, 0.20019531
        %v956 = vmul.f32 %v940, 0.20019531
        %v957 = vpack.c.bf16 %v942, %v941
        %v958 = vpack.c.bf16 %v944, %v943
        %v959 = vpack.c.bf16 %v946, %v945
        %v960 = vpack.c.bf16 %v948, %v947
        %v961 = vpack.c.bf16 %v950, %v949
        %v962 = vpack.c.bf16 %v952, %v951
        %v963 = vpack.c.bf16 %v954, %v953
        %v964 = vpack.c.bf16 %v956, %v955
        %v965 = vunpack.c.l.bf16 %v957
        %v966 = vunpack.c.h.bf16 %v957
        %v967 = vunpack.c.l.bf16 %v958
        %v968 = vunpack.c.h.bf16 %v958
        %v969 = vunpack.c.l.bf16 %v959
        %v970 = vunpack.c.h.bf16 %v959
        %v971 = vunpack.c.l.bf16 %v960
        %v972 = vunpack.c.h.bf16 %v960
        %v973 = vunpack.c.l.bf16 %v961
        %v974 = vunpack.c.h.bf16 %v961
        %v975 = vunpack.c.l.bf16 %v962
        %v976 = vunpack.c.h.bf16 %v962
        %v977 = vunpack.c.l.bf16 %v963
        %v978 = vunpack.c.h.bf16 %v963
        %v979 = vunpack.c.l.bf16 %v964
        %v980 = vunpack.c.h.bf16 %v964
        %v981 = vmax.f32 %v925, %v965
        %v982 = vmax.f32 %v926, %v966
        %v983 = vmax.f32 %v927, %v967
        %v984 = vmax.f32 %v928, %v968
        %v985 = vmax.f32 %v929, %v969
        %v986 = vmax.f32 %v930, %v970
        %v987 = vmax.f32 %v931, %v971
        %v988 = vmax.f32 %v932, %v972
        %v989 = vmax.f32 %v933, %v973
        %v990 = vmax.f32 %v934, %v974
        %v991 = vmax.f32 %v935, %v975
        %v992 = vmax.f32 %v936, %v976
        %v993 = vmax.f32 %v937, %v977
        %v994 = vmax.f32 %v938, %v978
        %v995 = vmax.f32 %v939, %v979
        %v996 = vmax.f32 %v940, %v980
        %v997 = vpack.c.bf16 %v983, %v981
        %v998 = vpack.c.bf16 %v984, %v982
        %v999 = vpack.c.bf16 %v987, %v985
        %v1000 = vpack.c.bf16 %v988, %v986
        %v1001 = vpack.c.bf16 %v991, %v989
        %v1002 = vpack.c.bf16 %v992, %v990
        %v1003 = vpack.c.bf16 %v995, %v993
        %v1004 = vpack.c.bf16 %v996, %v994
        %v1005 = vld [vmem:[%s7] sm:$0xf]
        %v1006 = vld [vmem:[%s7 + $0x4] sm:$0xf]
        %v1007 = vld [vmem:[%s7 + $0x8] sm:$0xf]
        %v1008 = vld [vmem:[%s7 + $0xc] sm:$0xf]
        %v1009 = vld [vmem:[%s7 + $0x10] sm:$0xf]
        %v1010 = vld [vmem:[%s7 + $0x14] sm:$0xf]
        %v1011 = vld [vmem:[%s7 + $0x18] sm:$0xf]
        %v1012 = vld [vmem:[%s7 + $0x1c] sm:$0xf]
        %v1013 = vld [vmem:[%s7 + $0x20] sm:$0xf]
        %v1014 = vld [vmem:[%s7 + $0x24] sm:$0xf]
        %v1015 = vld [vmem:[%s7 + $0x28] sm:$0xf]
        %v1016 = vld [vmem:[%s7 + $0x2c] sm:$0xf]
        %v1017 = vld [vmem:[%s7 + $0x30] sm:$0xf]
        %v1018 = vld [vmem:[%s7 + $0x34] sm:$0xf]
        %v1019 = vld [vmem:[%s7 + $0x38] sm:$0xf]
        %v1020 = vld [vmem:[%s7 + $0x3c] sm:$0xf]
        %v1037 = vunpack.c.l.b16 %v1005
        %v1038 = vunpack.c.l.b16 %v1006
        %v1039 = vunpack.c.l.b16 %v1007
        %v1040 = vunpack.c.l.b16 %v1008
        %v1041 = vunpack.c.l.b16 %v1009
        %v1042 = vunpack.c.l.b16 %v1010
        %v1043 = vunpack.c.l.b16 %v1011
        %v1044 = vunpack.c.l.b16 %v1012
        %v1045 = vunpack.c.l.b16 %v1013
        %v1046 = vunpack.c.l.b16 %v1014
        %v1047 = vunpack.c.l.b16 %v1015
        %v1048 = vunpack.c.l.b16 %v1016
        %v1049 = vunpack.c.l.b16 %v1017
        %v1050 = vunpack.c.l.b16 %v1018
        %v1051 = vunpack.c.l.b16 %v1019
        %v1052 = vunpack.c.l.b16 %v1020
        %v1053 = vpack.c.b16 %v1038, %v1037
        %v1054 = vpack.c.b16 %v1040, %v1039
        %v1055 = vpack.c.b16 %v1042, %v1041
        %v1056 = vpack.c.b16 %v1044, %v1043
        %v1057 = vpack.c.b16 %v1046, %v1045
        %v1058 = vpack.c.b16 %v1048, %v1047
        %v1059 = vpack.c.b16 %v1050, %v1049
        %v1060 = vpack.c.b16 %v1052, %v1051
        %vm1061 = vcmask 523264
        %v1063 = vsel %vm1061, %v1053, 0
        %v1066 = vsel %vm1061, %v1054, 0
        %v1069 = vsel %vm1061, %v1055, 0
        %v1072 = vsel %vm1061, %v1056, 0
        %v1075 = vsel %vm1061, %v1057, 0
        %v1078 = vsel %vm1061, %v1058, 0
        %v1081 = vsel %vm1061, %v1059, 0
        %v1084 = vsel %vm1061, %v1060, 0
        %1086 = vmatpush.bf16.msra.mxu0 0
        %1087 = vmatpush.bf16.msra.mxu0 0
        %1088 = vmatpush.bf16.msra.mxu0 0
        %1089 = vmatpush.bf16.msra.mxu0 0
        %1090 = vmatpush.bf16.msra.mxu0 %v1003
        %1091 = vmatpush.bf16.msra.mxu0 %v1001
        %1092 = vmatpush.bf16.msra.mxu0 %v999
        %1093 = vmatpush.bf16.msra.mxu0 %v997
        %1094 = vmatmul.bf16.gmra.mxu0 %v1063
        %v1095 = vpop.f32.mrf.mxu0
        %v1096 = vadd.f32 0.0, %v1095
        %v1097 = vpop.f32.mrf.mxu0
        %v1098 = vadd.f32 0.0, %v1097
        %1099 = vmatmul.bf16.gmra.mxu0 %v1066
        %v1100 = vpop.f32.mrf.mxu0
        %v1101 = vadd.f32 0.0, %v1100
        %v1102 = vpop.f32.mrf.mxu0
        %v1103 = vadd.f32 0.0, %v1102
        %1104 = vmatmul.bf16.gmra.mxu0 %v1069
        %v1105 = vpop.f32.mrf.mxu0
        %v1106 = vadd.f32 0.0, %v1105
        %v1107 = vpop.f32.mrf.mxu0
        %v1108 = vadd.f32 0.0, %v1107
        %1109 = vmatmul.bf16.gmra.mxu0 %v1072
        %v1110 = vpop.f32.mrf.mxu0
        %v1111 = vadd.f32 0.0, %v1110
        %v1112 = vpop.f32.mrf.mxu0
        %v1113 = vadd.f32 0.0, %v1112
        %1114 = vmatmul.bf16.gmra.mxu0 %v1075
        %v1115 = vpop.f32.mrf.mxu0
        %v1116 = vadd.f32 0.0, %v1115
        %v1117 = vpop.f32.mrf.mxu0
        %v1118 = vadd.f32 0.0, %v1117
        %1119 = vmatmul.bf16.gmra.mxu0 %v1078
        %v1120 = vpop.f32.mrf.mxu0
        %v1121 = vadd.f32 0.0, %v1120
        %v1122 = vpop.f32.mrf.mxu0
        %v1123 = vadd.f32 0.0, %v1122
        %1124 = vmatmul.bf16.gmra.mxu0 %v1081
        %v1125 = vpop.f32.mrf.mxu0
        %v1126 = vadd.f32 0.0, %v1125
        %v1127 = vpop.f32.mrf.mxu0
        %v1128 = vadd.f32 0.0, %v1127
        %1129 = vmatmul.bf16.gmra.mxu0 %v1084
        %v1130 = vpop.f32.mrf.mxu0
        %v1131 = vadd.f32 0.0, %v1130
        %v1132 = vpop.f32.mrf.mxu0
        %v1133 = vadd.f32 0.0, %v1132
        %1134 = vdwg.mxu0
        %1135 = vmatpush.bf16.msra.mxu0 0
        %1136 = vmatpush.bf16.msra.mxu0 0
        %1137 = vmatpush.bf16.msra.mxu0 0
        %1138 = vmatpush.bf16.msra.mxu0 0
        %1139 = vmatpush.bf16.msra.mxu0 %v1004
        %1140 = vmatpush.bf16.msra.mxu0 %v1002
        %1141 = vmatpush.bf16.msra.mxu0 %v1000
        %1142 = vmatpush.bf16.msra.mxu0 %v998
        %1143 = vmatmul.bf16.gmra.mxu0 %v1063
        %v1144 = vpop.f32.mrf.mxu0
        %v1145 = vadd.f32 0.0, %v1144
        %v1146 = vpop.f32.mrf.mxu0
        %v1147 = vadd.f32 0.0, %v1146
        %1148 = vmatmul.bf16.gmra.mxu0 %v1066
        %v1149 = vpop.f32.mrf.mxu0
        %v1150 = vadd.f32 0.0, %v1149
        %v1151 = vpop.f32.mrf.mxu0
        %v1152 = vadd.f32 0.0, %v1151
        %1153 = vmatmul.bf16.gmra.mxu0 %v1069
        %v1154 = vpop.f32.mrf.mxu0
        %v1155 = vadd.f32 0.0, %v1154
        %v1156 = vpop.f32.mrf.mxu0
        %v1157 = vadd.f32 0.0, %v1156
        %1158 = vmatmul.bf16.gmra.mxu0 %v1072
        %v1159 = vpop.f32.mrf.mxu0
        %v1160 = vadd.f32 0.0, %v1159
        %v1161 = vpop.f32.mrf.mxu0
        %v1162 = vadd.f32 0.0, %v1161
        %1163 = vmatmul.bf16.gmra.mxu0 %v1075
        %v1164 = vpop.f32.mrf.mxu0
        %v1165 = vadd.f32 0.0, %v1164
        %v1166 = vpop.f32.mrf.mxu0
        %v1167 = vadd.f32 0.0, %v1166
        %1168 = vmatmul.bf16.gmra.mxu0 %v1078
        %v1169 = vpop.f32.mrf.mxu0
        %v1170 = vadd.f32 0.0, %v1169
        %v1171 = vpop.f32.mrf.mxu0
        %v1172 = vadd.f32 0.0, %v1171
        %1173 = vmatmul.bf16.gmra.mxu0 %v1081
        %v1174 = vpop.f32.mrf.mxu0
        %v1175 = vadd.f32 0.0, %v1174
        %v1176 = vpop.f32.mrf.mxu0
        %v1177 = vadd.f32 0.0, %v1176
        %1178 = vmatmul.bf16.gmra.mxu0 %v1084
        %v1179 = vpop.f32.mrf.mxu0
        %v1180 = vadd.f32 0.0, %v1179
        %v1181 = vpop.f32.mrf.mxu0
        %v1182 = vadd.f32 0.0, %v1181
        %1183 = vdwg.mxu0
        %v1184 = vpack.c.bf16 %v1145, %v1096
        %v1185 = vpack.c.bf16 %v1147, %v1098
        %v1186 = vpack.c.bf16 %v1150, %v1101
        %v1187 = vpack.c.bf16 %v1152, %v1103
        %v1188 = vpack.c.bf16 %v1155, %v1106
        %v1189 = vpack.c.bf16 %v1157, %v1108
        %v1190 = vpack.c.bf16 %v1160, %v1111
        %v1191 = vpack.c.bf16 %v1162, %v1113
        %v1192 = vpack.c.bf16 %v1165, %v1116
        %v1193 = vpack.c.bf16 %v1167, %v1118
        %v1194 = vpack.c.bf16 %v1170, %v1121
        %v1195 = vpack.c.bf16 %v1172, %v1123
        %v1196 = vpack.c.bf16 %v1175, %v1126
        %v1197 = vpack.c.bf16 %v1177, %v1128
        %v1198 = vpack.c.bf16 %v1180, %v1131
        %v1199 = vpack.c.bf16 %v1182, %v1133
        %v1200 = vld [vmem:[%s8] sm:$0xf]
        %v1201 = vld [vmem:[%s8 + $0x4] sm:$0xf]
        %v1202 = vld [vmem:[%s8 + $0x8] sm:$0xf]
        %v1203 = vld [vmem:[%s8 + $0xc] sm:$0xf]
        %v1204 = vld [vmem:[%s8 + $0x10] sm:$0xf]
        %v1205 = vld [vmem:[%s8 + $0x14] sm:$0xf]
        %v1206 = vld [vmem:[%s8 + $0x18] sm:$0xf]
        %v1207 = vld [vmem:[%s8 + $0x1c] sm:$0xf]
        %v1208 = vld [vmem:[%s8 + $0x20] sm:$0xf]
        %v1209 = vld [vmem:[%s8 + $0x24] sm:$0xf]
        %v1210 = vld [vmem:[%s8 + $0x28] sm:$0xf]
        %v1211 = vld [vmem:[%s8 + $0x2c] sm:$0xf]
        %v1212 = vld [vmem:[%s8 + $0x30] sm:$0xf]
        %v1213 = vld [vmem:[%s8 + $0x34] sm:$0xf]
        %v1214 = vld [vmem:[%s8 + $0x38] sm:$0xf]
        %v1215 = vld [vmem:[%s8 + $0x3c] sm:$0xf]
        %1217 = vset.pattern.permute.xlu0 0
        %1218 = vperm.xlu0 %1217, %v1200
        %v1219 = vpop.permute.xlu0 %1218
        %v1222 = vunpack.c.l.s4 839922192
        %v1223 = vunpack.c.0.s8 %v1222
        %v1224 = vperm.slane %v1219, %v1223
        %1226 = vset.pattern.permute.xlu0 0
        %1227 = vperm.xlu0 %1226, %v1201
        %v1228 = vpop.permute.xlu0 %1227
        %v1231 = vunpack.c.l.s4 839922192
        %v1232 = vunpack.c.0.s8 %v1231
        %v1233 = vperm.slane %v1228, %v1232
        %1235 = vset.pattern.permute.xlu0 0
        %1236 = vperm.xlu0 %1235, %v1202
        %v1237 = vpop.permute.xlu0 %1236
        %v1240 = vunpack.c.l.s4 839922192
        %v1241 = vunpack.c.0.s8 %v1240
        %v1242 = vperm.slane %v1237, %v1241
        %1244 = vset.pattern.permute.xlu0 0
        %1245 = vperm.xlu0 %1244, %v1203
        %v1246 = vpop.permute.xlu0 %1245
        %v1249 = vunpack.c.l.s4 839922192
        %v1250 = vunpack.c.0.s8 %v1249
        %v1251 = vperm.slane %v1246, %v1250
        %1253 = vset.pattern.permute.xlu0 0
        %1254 = vperm.xlu0 %1253, %v1204
        %v1255 = vpop.permute.xlu0 %1254
        %v1258 = vunpack.c.l.s4 839922192
        %v1259 = vunpack.c.0.s8 %v1258
        %v1260 = vperm.slane %v1255, %v1259
        %1262 = vset.pattern.permute.xlu0 0
        %1263 = vperm.xlu0 %1262, %v1205
        %v1264 = vpop.permute.xlu0 %1263
        %v1267 = vunpack.c.l.s4 839922192
        %v1268 = vunpack.c.0.s8 %v1267
        %v1269 = vperm.slane %v1264, %v1268
        %1271 = vset.pattern.permute.xlu0 0
        %1272 = vperm.xlu0 %1271, %v1206
        %v1273 = vpop.permute.xlu0 %1272
        %v1276 = vunpack.c.l.s4 839922192
        %v1277 = vunpack.c.0.s8 %v1276
        %v1278 = vperm.slane %v1273, %v1277
        %1280 = vset.pattern.permute.xlu0 0
        %1281 = vperm.xlu0 %1280, %v1207
        %v1282 = vpop.permute.xlu0 %1281
        %v1285 = vunpack.c.l.s4 839922192
        %v1286 = vunpack.c.0.s8 %v1285
        %v1287 = vperm.slane %v1282, %v1286
        %1289 = vset.pattern.permute.xlu0 0
        %1290 = vperm.xlu0 %1289, %v1208
        %v1291 = vpop.permute.xlu0 %1290
        %v1294 = vunpack.c.l.s4 839922192
        %v1295 = vunpack.c.0.s8 %v1294
        %v1296 = vperm.slane %v1291, %v1295
        %1298 = vset.pattern.permute.xlu0 0
        %1299 = vperm.xlu0 %1298, %v1209
        %v1300 = vpop.permute.xlu0 %1299
        %v1303 = vunpack.c.l.s4 839922192
        %v1304 = vunpack.c.0.s8 %v1303
        %v1305 = vperm.slane %v1300, %v1304
        %1307 = vset.pattern.permute.xlu0 0
        %1308 = vperm.xlu0 %1307, %v1210
        %v1309 = vpop.permute.xlu0 %1308
        %v1312 = vunpack.c.l.s4 839922192
        %v1313 = vunpack.c.0.s8 %v1312
        %v1314 = vperm.slane %v1309, %v1313
        %1316 = vset.pattern.permute.xlu0 0
        %1317 = vperm.xlu0 %1316, %v1211
        %v1318 = vpop.permute.xlu0 %1317
        %v1321 = vunpack.c.l.s4 839922192
        %v1322 = vunpack.c.0.s8 %v1321
        %v1323 = vperm.slane %v1318, %v1322
        %1325 = vset.pattern.permute.xlu0 0
        %1326 = vperm.xlu0 %1325, %v1212
        %v1327 = vpop.permute.xlu0 %1326
        %v1330 = vunpack.c.l.s4 839922192
        %v1331 = vunpack.c.0.s8 %v1330
        %v1332 = vperm.slane %v1327, %v1331
        %1334 = vset.pattern.permute.xlu0 0
        %1335 = vperm.xlu0 %1334, %v1213
        %v1336 = vpop.permute.xlu0 %1335
        %v1339 = vunpack.c.l.s4 839922192
        %v1340 = vunpack.c.0.s8 %v1339
        %v1341 = vperm.slane %v1336, %v1340
        %1343 = vset.pattern.permute.xlu0 0
        %1344 = vperm.xlu0 %1343, %v1214
        %v1345 = vpop.permute.xlu0 %1344
        %v1348 = vunpack.c.l.s4 839922192
        %v1349 = vunpack.c.0.s8 %v1348
        %v1350 = vperm.slane %v1345, %v1349
        %1352 = vset.pattern.permute.xlu0 0
        %1353 = vperm.xlu0 %1352, %v1215
        %v1354 = vpop.permute.xlu0 %1353
        %v1357 = vunpack.c.l.s4 839922192
        %v1358 = vunpack.c.0.s8 %v1357
        %v1359 = vperm.slane %v1354, %v1358
        %v1360 = vunpack.c.l.bf16 %v1184
        %v1361 = vunpack.c.h.bf16 %v1184
        %v1362 = vunpack.c.l.bf16 %v1185
        %v1363 = vunpack.c.h.bf16 %v1185
        %v1364 = vunpack.c.l.bf16 %v1186
        %v1365 = vunpack.c.h.bf16 %v1186
        %v1366 = vunpack.c.l.bf16 %v1187
        %v1367 = vunpack.c.h.bf16 %v1187
        %v1368 = vunpack.c.l.bf16 %v1188
        %v1369 = vunpack.c.h.bf16 %v1188
        %v1370 = vunpack.c.l.bf16 %v1189
        %v1371 = vunpack.c.h.bf16 %v1189
        %v1372 = vunpack.c.l.bf16 %v1190
        %v1373 = vunpack.c.h.bf16 %v1190
        %v1374 = vunpack.c.l.bf16 %v1191
        %v1375 = vunpack.c.h.bf16 %v1191
        %v1376 = vunpack.c.l.bf16 %v1192
        %v1377 = vunpack.c.h.bf16 %v1192
        %v1378 = vunpack.c.l.bf16 %v1193
        %v1379 = vunpack.c.h.bf16 %v1193
        %v1380 = vunpack.c.l.bf16 %v1194
        %v1381 = vunpack.c.h.bf16 %v1194
        %v1382 = vunpack.c.l.bf16 %v1195
        %v1383 = vunpack.c.h.bf16 %v1195
        %v1384 = vunpack.c.l.bf16 %v1196
        %v1385 = vunpack.c.h.bf16 %v1196
        %v1386 = vunpack.c.l.bf16 %v1197
        %v1387 = vunpack.c.h.bf16 %v1197
        %v1388 = vunpack.c.l.bf16 %v1198
        %v1389 = vunpack.c.h.bf16 %v1198
        %v1390 = vunpack.c.l.bf16 %v1199
        %v1391 = vunpack.c.h.bf16 %v1199
        %v1392 = vunpack.c.l.bf16 %v1224
        %v1393 = vunpack.c.l.bf16 %v1233
        %v1394 = vunpack.c.l.bf16 %v1242
        %v1395 = vunpack.c.l.bf16 %v1251
        %v1396 = vunpack.c.l.bf16 %v1260
        %v1397 = vunpack.c.l.bf16 %v1269
        %v1398 = vunpack.c.l.bf16 %v1278
        %v1399 = vunpack.c.l.bf16 %v1287
        %v1400 = vunpack.c.l.bf16 %v1296
        %v1401 = vunpack.c.l.bf16 %v1305
        %v1402 = vunpack.c.l.bf16 %v1314
        %v1403 = vunpack.c.l.bf16 %v1323
        %v1404 = vunpack.c.l.bf16 %v1332
        %v1405 = vunpack.c.l.bf16 %v1341
        %v1406 = vunpack.c.l.bf16 %v1350
        %v1407 = vunpack.c.l.bf16 %v1359
        %v1408 = vadd.f32 %v1360, %v1392
        %v1409 = vadd.f32 %v1361, %v1392
        %v1410 = vadd.f32 %v1362, %v1393
        %v1411 = vadd.f32 %v1363, %v1393
        %v1412 = vadd.f32 %v1364, %v1394
        %v1413 = vadd.f32 %v1365, %v1394
        %v1414 = vadd.f32 %v1366, %v1395
        %v1415 = vadd.f32 %v1367, %v1395
        %v1416 = vadd.f32 %v1368, %v1396
        %v1417 = vadd.f32 %v1369, %v1396
        %v1418 = vadd.f32 %v1370, %v1397
        %v1419 = vadd.f32 %v1371, %v1397
        %v1420 = vadd.f32 %v1372, %v1398
        %v1421 = vadd.f32 %v1373, %v1398
        %v1422 = vadd.f32 %v1374, %v1399
        %v1423 = vadd.f32 %v1375, %v1399
        %v1424 = vadd.f32 %v1376, %v1400
        %v1425 = vadd.f32 %v1377, %v1400
        %v1426 = vadd.f32 %v1378, %v1401
        %v1427 = vadd.f32 %v1379, %v1401
        %v1428 = vadd.f32 %v1380, %v1402
        %v1429 = vadd.f32 %v1381, %v1402
        %v1430 = vadd.f32 %v1382, %v1403
        %v1431 = vadd.f32 %v1383, %v1403
        %v1432 = vadd.f32 %v1384, %v1404
        %v1433 = vadd.f32 %v1385, %v1404
        %v1434 = vadd.f32 %v1386, %v1405
        %v1435 = vadd.f32 %v1387, %v1405
        %v1436 = vadd.f32 %v1388, %v1406
        %v1437 = vadd.f32 %v1389, %v1406
        %v1438 = vadd.f32 %v1390, %v1407
        %v1439 = vadd.f32 %v1391, %v1407
        %v1440 = vpack.c.bf16 %v1409, %v1408
        %v1441 = vpack.c.bf16 %v1411, %v1410
        %v1442 = vpack.c.bf16 %v1413, %v1412
        %v1443 = vpack.c.bf16 %v1415, %v1414
        %v1444 = vpack.c.bf16 %v1417, %v1416
        %v1445 = vpack.c.bf16 %v1419, %v1418
        %v1446 = vpack.c.bf16 %v1421, %v1420
        %v1447 = vpack.c.bf16 %v1423, %v1422
        %v1448 = vpack.c.bf16 %v1425, %v1424
        %v1449 = vpack.c.bf16 %v1427, %v1426
        %v1450 = vpack.c.bf16 %v1429, %v1428
        %v1451 = vpack.c.bf16 %v1431, %v1430
        %v1452 = vpack.c.bf16 %v1433, %v1432
        %v1453 = vpack.c.bf16 %v1435, %v1434
        %v1454 = vpack.c.bf16 %v1437, %v1436
        %v1455 = vpack.c.bf16 %v1439, %v1438
        %v1456 = vunpack.c.l.bf16 %v1440
        %v1457 = vunpack.c.h.bf16 %v1440
        %v1458 = vunpack.c.l.bf16 %v1441
        %v1459 = vunpack.c.h.bf16 %v1441
        %v1460 = vunpack.c.l.bf16 %v1442
        %v1461 = vunpack.c.h.bf16 %v1442
        %v1462 = vunpack.c.l.bf16 %v1443
        %v1463 = vunpack.c.h.bf16 %v1443
        %v1464 = vunpack.c.l.bf16 %v1444
        %v1465 = vunpack.c.h.bf16 %v1444
        %v1466 = vunpack.c.l.bf16 %v1445
        %v1467 = vunpack.c.h.bf16 %v1445
        %v1468 = vunpack.c.l.bf16 %v1446
        %v1469 = vunpack.c.h.bf16 %v1446
        %v1470 = vunpack.c.l.bf16 %v1447
        %v1471 = vunpack.c.h.bf16 %v1447
        %v1472 = vunpack.c.l.bf16 %v1448
        %v1473 = vunpack.c.h.bf16 %v1448
        %v1474 = vunpack.c.l.bf16 %v1449
        %v1475 = vunpack.c.h.bf16 %v1449
        %v1476 = vunpack.c.l.bf16 %v1450
        %v1477 = vunpack.c.h.bf16 %v1450
        %v1478 = vunpack.c.l.bf16 %v1451
        %v1479 = vunpack.c.h.bf16 %v1451
        %v1480 = vunpack.c.l.bf16 %v1452
        %v1481 = vunpack.c.h.bf16 %v1452
        %v1482 = vunpack.c.l.bf16 %v1453
        %v1483 = vunpack.c.h.bf16 %v1453
        %v1484 = vunpack.c.l.bf16 %v1454
        %v1485 = vunpack.c.h.bf16 %v1454
        %v1486 = vunpack.c.l.bf16 %v1455
        %v1487 = vunpack.c.h.bf16 %v1455
        %v1488 = vmul.f32 %v1456, 0.20019531
        %v1489 = vmul.f32 %v1457, 0.20019531
        %v1490 = vmul.f32 %v1458, 0.20019531
        %v1491 = vmul.f32 %v1459, 0.20019531
        %v1492 = vmul.f32 %v1460, 0.20019531
        %v1493 = vmul.f32 %v1461, 0.20019531
        %v1494 = vmul.f32 %v1462, 0.20019531
        %v1495 = vmul.f32 %v1463, 0.20019531
        %v1496 = vmul.f32 %v1464, 0.20019531
        %v1497 = vmul.f32 %v1465, 0.20019531
        %v1498 = vmul.f32 %v1466, 0.20019531
        %v1499 = vmul.f32 %v1467, 0.20019531
        %v1500 = vmul.f32 %v1468, 0.20019531
        %v1501 = vmul.f32 %v1469, 0.20019531
        %v1502 = vmul.f32 %v1470, 0.20019531
        %v1503 = vmul.f32 %v1471, 0.20019531
        %v1504 = vmul.f32 %v1472, 0.20019531
        %v1505 = vmul.f32 %v1473, 0.20019531
        %v1506 = vmul.f32 %v1474, 0.20019531
        %v1507 = vmul.f32 %v1475, 0.20019531
        %v1508 = vmul.f32 %v1476, 0.20019531
        %v1509 = vmul.f32 %v1477, 0.20019531
        %v1510 = vmul.f32 %v1478, 0.20019531
        %v1511 = vmul.f32 %v1479, 0.20019531
        %v1512 = vmul.f32 %v1480, 0.20019531
        %v1513 = vmul.f32 %v1481, 0.20019531
        %v1514 = vmul.f32 %v1482, 0.20019531
        %v1515 = vmul.f32 %v1483, 0.20019531
        %v1516 = vmul.f32 %v1484, 0.20019531
        %v1517 = vmul.f32 %v1485, 0.20019531
        %v1518 = vmul.f32 %v1486, 0.20019531
        %v1519 = vmul.f32 %v1487, 0.20019531
        %v1520 = vpack.c.bf16 %v1489, %v1488
        %v1521 = vpack.c.bf16 %v1491, %v1490
        %v1522 = vpack.c.bf16 %v1493, %v1492
        %v1523 = vpack.c.bf16 %v1495, %v1494
        %v1524 = vpack.c.bf16 %v1497, %v1496
        %v1525 = vpack.c.bf16 %v1499, %v1498
        %v1526 = vpack.c.bf16 %v1501, %v1500
        %v1527 = vpack.c.bf16 %v1503, %v1502
        %v1528 = vpack.c.bf16 %v1505, %v1504
        %v1529 = vpack.c.bf16 %v1507, %v1506
        %v1530 = vpack.c.bf16 %v1509, %v1508
        %v1531 = vpack.c.bf16 %v1511, %v1510
        %v1532 = vpack.c.bf16 %v1513, %v1512
        %v1533 = vpack.c.bf16 %v1515, %v1514
        %v1534 = vpack.c.bf16 %v1517, %v1516
        %v1535 = vpack.c.bf16 %v1519, %v1518
        %v1536 = vunpack.c.l.bf16 %v1520
        %v1537 = vunpack.c.h.bf16 %v1520
        %v1538 = vunpack.c.l.bf16 %v1521
        %v1539 = vunpack.c.h.bf16 %v1521
        %v1540 = vunpack.c.l.bf16 %v1522
        %v1541 = vunpack.c.h.bf16 %v1522
        %v1542 = vunpack.c.l.bf16 %v1523
        %v1543 = vunpack.c.h.bf16 %v1523
        %v1544 = vunpack.c.l.bf16 %v1524
        %v1545 = vunpack.c.h.bf16 %v1524
        %v1546 = vunpack.c.l.bf16 %v1525
        %v1547 = vunpack.c.h.bf16 %v1525
        %v1548 = vunpack.c.l.bf16 %v1526
        %v1549 = vunpack.c.h.bf16 %v1526
        %v1550 = vunpack.c.l.bf16 %v1527
        %v1551 = vunpack.c.h.bf16 %v1527
        %v1552 = vunpack.c.l.bf16 %v1528
        %v1553 = vunpack.c.h.bf16 %v1528
        %v1554 = vunpack.c.l.bf16 %v1529
        %v1555 = vunpack.c.h.bf16 %v1529
        %v1556 = vunpack.c.l.bf16 %v1530
        %v1557 = vunpack.c.h.bf16 %v1530
        %v1558 = vunpack.c.l.bf16 %v1531
        %v1559 = vunpack.c.h.bf16 %v1531
        %v1560 = vunpack.c.l.bf16 %v1532
        %v1561 = vunpack.c.h.bf16 %v1532
        %v1562 = vunpack.c.l.bf16 %v1533
        %v1563 = vunpack.c.h.bf16 %v1533
        %v1564 = vunpack.c.l.bf16 %v1534
        %v1565 = vunpack.c.h.bf16 %v1534
        %v1566 = vunpack.c.l.bf16 %v1535
        %v1567 = vunpack.c.h.bf16 %v1535
        %v1568 = vmax.f32 %v1456, %v1536
        %v1569 = vmax.f32 %v1457, %v1537
        %v1570 = vmax.f32 %v1458, %v1538
        %v1571 = vmax.f32 %v1459, %v1539
        %v1572 = vmax.f32 %v1460, %v1540
        %v1573 = vmax.f32 %v1461, %v1541
        %v1574 = vmax.f32 %v1462, %v1542
        %v1575 = vmax.f32 %v1463, %v1543
        %v1576 = vmax.f32 %v1464, %v1544
        %v1577 = vmax.f32 %v1465, %v1545
        %v1578 = vmax.f32 %v1466, %v1546
        %v1579 = vmax.f32 %v1467, %v1547
        %v1580 = vmax.f32 %v1468, %v1548
        %v1581 = vmax.f32 %v1469, %v1549
        %v1582 = vmax.f32 %v1470, %v1550
        %v1583 = vmax.f32 %v1471, %v1551
        %v1584 = vmax.f32 %v1472, %v1552
        %v1585 = vmax.f32 %v1473, %v1553
        %v1586 = vmax.f32 %v1474, %v1554
        %v1587 = vmax.f32 %v1475, %v1555
        %v1588 = vmax.f32 %v1476, %v1556
        %v1589 = vmax.f32 %v1477, %v1557
        %v1590 = vmax.f32 %v1478, %v1558
        %v1591 = vmax.f32 %v1479, %v1559
        %v1592 = vmax.f32 %v1480, %v1560
        %v1593 = vmax.f32 %v1481, %v1561
        %v1594 = vmax.f32 %v1482, %v1562
        %v1595 = vmax.f32 %v1483, %v1563
        %v1596 = vmax.f32 %v1484, %v1564
        %v1597 = vmax.f32 %v1485, %v1565
        %v1598 = vmax.f32 %v1486, %v1566
        %v1599 = vmax.f32 %v1487, %v1567
        %v1600 = vpack.c.bf16 %v1570, %v1568
        %v1601 = vpack.c.bf16 %v1571, %v1569
        %v1602 = vpack.c.bf16 %v1574, %v1572
        %v1603 = vpack.c.bf16 %v1575, %v1573
        %v1604 = vpack.c.bf16 %v1578, %v1576
        %v1605 = vpack.c.bf16 %v1579, %v1577
        %v1606 = vpack.c.bf16 %v1582, %v1580
        %v1607 = vpack.c.bf16 %v1583, %v1581
        %v1608 = vpack.c.bf16 %v1586, %v1584
        %v1609 = vpack.c.bf16 %v1587, %v1585
        %v1610 = vpack.c.bf16 %v1590, %v1588
        %v1611 = vpack.c.bf16 %v1591, %v1589
        %v1612 = vpack.c.bf16 %v1594, %v1592
        %v1613 = vpack.c.bf16 %v1595, %v1593
        %v1614 = vpack.c.bf16 %v1598, %v1596
        %v1615 = vpack.c.bf16 %v1599, %v1597
        %v1616 = vld [vmem:[%s9] sm:$0x1]
        %v1617 = vld [vmem:[#allocation2] sm:$0x1]
        %1619 = vset.pattern.permute.xlu0 0
        %1620 = vperm.xlu0 %1619, %v1617
        %v1621 = vpop.permute.xlu0 %1620
        %v1623 = vperm.slane %v1621, 0
        %1624 = vmatpush.bf16.msra.mxu0 %v1614
        %1625 = vmatpush.bf16.msra.mxu0 %v1612
        %1626 = vmatpush.bf16.msra.mxu0 %v1610
        %1627 = vmatpush.bf16.msra.mxu0 %v1608
        %1628 = vmatpush.bf16.msra.mxu0 %v1606
        %1629 = vmatpush.bf16.msra.mxu0 %v1604
        %1630 = vmatpush.bf16.msra.mxu0 %v1602
        %1631 = vmatpush.bf16.msra.mxu0 %v1600
        %1632 = vmatmul.bf16.gmra.mxu0 %v1616
        %v1633 = vpop.f32.mrf.mxu0
        %v1634 = vadd.f32 %v1623, %v1633
        %v1635 = vpop.f32.mrf.mxu0
        %1636 = vdwg.mxu0
        %1637 = vmatpush.bf16.msra.mxu0 %v1615
        %1638 = vmatpush.bf16.msra.mxu0 %v1613
        %1639 = vmatpush.bf16.msra.mxu0 %v1611
        %1640 = vmatpush.bf16.msra.mxu0 %v1609
        %1641 = vmatpush.bf16.msra.mxu0 %v1607
        %1642 = vmatpush.bf16.msra.mxu0 %v1605
        %1643 = vmatpush.bf16.msra.mxu0 %v1603
        %1644 = vmatpush.bf16.msra.mxu0 %v1601
        %1645 = vmatmul.bf16.gmra.mxu0 %v1616
        %v1646 = vpop.f32.mrf.mxu0
        %v1647 = vadd.f32 %v1623, %v1646
        %v1648 = vpop.f32.mrf.mxu0
        %1649 = vdwg.mxu0
        %v1652 = vrot.slane %v1647, 7
        %vm1653 = vcmask 1040384
        %v1654 = vsel %vm1653, %v1634, %v1652
        %v1656 = vlaneseq
        %vm1657 = vcmp.ge.s32.totalorder %v1656, 0
        %vm1658 = vcmp.lt.s32.totalorder %v1656, 256
        %vm1659 = vmand %vm1657, %vm1658
        %1660 = vst.msk [vmem:[%s406] sm:$0x3] %vm1659, %v1654
        %s1661 = sand.u32 %s287, 1
        %s1662 = scalar_lea.sflag [#allocation4], %s1661
        %s1663 = sand.u32 %s287, 1
        %s1664 = smul.addr %s1663, 2
        %s1665 = scalar_lea.vmem [#allocation3], %s1664
        // Predicated region
        $region65: #{tpu_custom_call.1} parent=63 // pred_check
          %p1666 = pneg %p297
        $region66: #{tpu_custom_call.1} parent=63 // pred_check_branch
          %1668 = sbr.rel (%p1666) target = $region68
        $region67: #{tpu_custom_call.1} parent=63 // pred_region
          %s1669 = smul.u32 2, %s32
          %1671 = vsyncadd %s1662, 0
          %s1672 = smul.addr %s31, 2
          %s1673 = sadd.s32 %s1669, %s1672
          %s1674 = scalar_lea.hbm %s11, %s1673
          %s1676 = sshll.u32 %s1665, 4
          %s1677 = int_to_ptr.vmem [resolvable:$true] %s1676
          %s1678 = sshll.u32 %s1674, 4
          %s1679 = int_to_ptr.hbm [resolvable:$true] %s1678
          %1681 = dma.vmem_to_hbm [thread:$0]  %s1677, 32, %s1679, %s1662
        $region68: #{tpu_custom_call.1} parent=63 // pred_fallthru
          _
      $region64: #{tpu_custom_call.1} parent=5 // pred_fallthru
        _
      %p1682 = scmp.le.s32.totalorder 2, %s22
      // Predicated region
      $region69: #{tpu_custom_call.1} parent=5 // pred_check
        %p1683 = pneg %p1682
      $region70: #{tpu_custom_call.1} parent=5 // pred_check_branch
        %1685 = sbr.rel (%p1683) target = $region72
      $region71: #{tpu_custom_call.1} parent=5 // pred_region
        %s1686 = ssub.s32 %s22, 2
        // Predicated region
        $region73: #{tpu_custom_call.1} parent=71 // pred_check
          %p1687 = pneg %p303
        $region74: #{tpu_custom_call.1} parent=71 // pred_check_branch
          %1689 = sbr.rel (%p1687) target = $region76
        $region75: #{tpu_custom_call.1} parent=71 // pred_region
          %s1690 = sand.u32 %s288, 1
          %s1691 = scalar_lea.sflag [#allocation4], %s1690
          %s1692 = sand.u32 %s288, 1
          %s1693 = smul.addr %s1692, 2
          %s1694 = scalar_lea.vmem [#allocation3], %s1693
          %1696 = dma.done %s1691, 32
        $region76: #{tpu_custom_call.1} parent=71 // pred_fallthru
          _
      $region72: #{tpu_custom_call.1} parent=5 // pred_fallthru
        _
    $region6: #{tpu_custom_call.1} parent=1 // loop_footer
      %s26 = sadd.s32 1, %s22
    $region7: #{tpu_custom_call.1} parent=1 // loop_footer_branch
      %21 = sbr.rel target = $region3
    $region8: #{tpu_custom_call.1} parent=1 // loop_exit
      _
    %1697 = vsyncpa [#allocation4], 1
    %s1698 = scalar_lea.sflag [#allocation4], 1
    %1699 = vsyncpa %s1698, 1

</llo_original>
